<compile_context>
chip_gen: v7x
topology: tpu7x:2x2x1
jax: 0.10.0
libtpu: 0.0.40
codegen_flags: <defaults>
</compile_context>

<pallas_src>
import numpy as np
import jax
import jax.numpy as jnp
from jax import lax
from jax.experimental import pallas as pl
from jax.experimental.pallas import tpu as pltpu

INPUT_DIM = 2
HIDDEN = 64
DIM = 64                         # sinusoidal embedding dim
TIME_EMBED_DIM = 256
WIDTH2 = HIDDEN // 2             # 32
WIDTH3 = HIDDEN // 4             # 16
BN_EPS = 1e-5
WSMALL_ROWS = 64                 # max in_features among the "small" weights
LANE = 128


def _pad_to(n, m=LANE):
    return ((n + m - 1) // m) * m


# ---------------------------------------------------------------------------
# Static packed-parameter layouts (shared by the host-side packer and the kernel).
# Every entry starts at a multiple of 128 lanes and is zero-padded to its slot.
#   slab 0: w256   (256, 640) bf16 = [ wt2 (256 lanes) | wtd0 @0 | wtd1 @128 | wtd2 @256 ]
#   slab 1: wsmall (64, 1152) bf16 = lane-concat of every weight with <=64 input rows
#                                    (rows zero-padded to 64, cols padded to 128 slots)
#   slab 2: vec    (1, 2944) f32   = every bias / BN gamma / BN beta / the two rows of w01
# ---------------------------------------------------------------------------
TD_SLOT0 = 0
TD_SLOT1 = LANE
TD_SLOT2 = 2 * LANE
TD_W_PAD = 3 * LANE              # fused time-dep projection width, lane-slot padded

_WSMALL_ORDER = [
    ("wt1", DIM, TIME_EMBED_DIM),
    ("w02", HIDDEN, HIDDEN),
    ("w11", HIDDEN, WIDTH2),
    ("w12", WIDTH2, WIDTH2),
    ("w21", WIDTH2, WIDTH3),
    ("w22", WIDTH3, WIDTH3),
    ("w23", WIDTH3, WIDTH3),
    ("wf", WIDTH3, 2),
]
WSMALL_LAYOUT = {}
_off = 0
for _n, _r, _c in _WSMALL_ORDER:
    WSMALL_LAYOUT[_n] = (_off, _r, _c)
    _off += _pad_to(_c)
WSMALL_W = _off                  # 256 + 7*128 = 1152

_VEC_ORDER = [
    ("bt1", TIME_EMBED_DIM), ("bt2", TIME_EMBED_DIM),
    ("b01", HIDDEN), ("b02", HIDDEN),
    ("btd", TD_W_PAD),           # fused time-dep bias, pre-padded to 3 lane slots
    ("g0", HIDDEN), ("be0", HIDDEN),
    ("b11", WIDTH2), ("b12", WIDTH2), ("g1", WIDTH2), ("be1", WIDTH2),
    ("b21", WIDTH3), ("b22", WIDTH3), ("g2", WIDTH3), ("be2", WIDTH3),
    ("b23", WIDTH3), ("bf", 2),
    ("w01r0", HIDDEN), ("w01r1", HIDDEN),
]
VEC_LAYOUT = {}
_off = 0
for _n, _s in _VEC_ORDER:
    VEC_LAYOUT[_n] = (_off, _s)
    _off += _pad_to(_s)
VEC_LEN = _off                   # 2944


def _gelu_exact(x):
    # PyTorch nn.GELU default (approximate='none') -> erf formulation
    return 0.5 * x * (1.0 + lax.erf(x * (1.0 / np.sqrt(2.0))))


def _silu(x):
    return x * jax.nn.sigmoid(x)


def _bn_train(x, gamma, beta):
    # nn.BatchNorm1d in training mode: biased batch statistics over the batch axis.
    # Single-pass moments keep the two cross-sublane reductions independent;
    # clamp the variance against f32 cancellation before rsqrt.
    mean = jnp.mean(x, axis=0, keepdims=True)
    var = jnp.maximum(jnp.mean(x * x, axis=0, keepdims=True) - mean * mean, 0.0)
    return (x - mean) * lax.rsqrt(var + BN_EPS) * gamma + beta


def noise_model_kernel(x_ref, t_ref, w256_ref, wsmall_ref, vec_ref, out_ref):
    f32 = jnp.float32
    bf16 = jnp.bfloat16

    def v(name):                                   # (1, size) bias-style row vector (f32)
        off, size = VEC_LAYOUT[name]
        return vec_ref[:, off:off + size]

    def w(name):                                   # (rows, cols) small weight window (bf16)
        off, rows, cols = WSMALL_LAYOUT[name]
        return wsmall_ref[0:rows, off:off + cols]

    def lin(h, wm, b):
        # bf16 x bf16 MXU pass, f32 accumulation, f32 bias add
        return jnp.dot(h.astype(bf16), wm, preferred_element_type=f32) + b

    x_in = x_ref[...]                              # (B, 2) f32
    t = t_ref[...]                                 # (B, 1) f32

    # --- SinusoidalPositionEmbeddings as a single phased sine:
    #     [sin(t*f) | cos(t*f)] == sin(t*[f|f] + [0 | pi/2]); freqs built in-kernel (no DMA).
    half = DIM // 2
    idx = lax.broadcasted_iota(jnp.int32, (1, DIM), 1)
    upper = idx >= half
    k = jnp.where(upper, idx - half, idx).astype(f32)
    freqs2 = jnp.exp(k * np.float32(-np.log(10000.0) / (half - 1)))
    phase = jnp.where(upper, np.float32(np.pi / 2), np.float32(0.0))
    temb = jnp.sin(t * freqs2 + phase)             # (B, DIM)

    # --- time_mlp: Linear(dim, T) -> GELU -> Linear(T, T); SiLU hoisted (shared by 3 blocks)
    te = _gelu_exact(lin(temb, w("wt1"), v("bt1")))
    te = lin(te, w256_ref[:, 0:TIME_EMBED_DIM], v("bt2"))            # (B, 256)
    te_silu = _silu(te)

    # --- fused time-dependent projections: one (256,384) bf16 matmul, then 128-lane-aligned
    #     static slices (wtd0/wtd1/wtd2 packed at lane slots 0/128/256).
    td = lin(te_silu, w256_ref[:, TIME_EMBED_DIM:TIME_EMBED_DIM + TD_W_PAD], v("btd"))
    td0 = td[:, TD_SLOT0:TD_SLOT0 + HIDDEN]
    td1 = td[:, TD_SLOT1:TD_SLOT1 + WIDTH2]
    td2 = td[:, TD_SLOT2:TD_SLOT2 + WIDTH3]

    # --- block 0 (K=2 first layer on the VPU as an outer-product sum, f32)
    x = jnp.tanh(x_in[:, 0:1] * v("w01r0") + x_in[:, 1:2] * v("w01r1") + v("b01"))
    x = jnp.tanh(_bn_train(lin(x, w("w02"), v("b02")), v("g0"), v("be0")))
    x = x + td0

    # --- block 1
    x = jnp.tanh(lin(x, w("w11"), v("b11")))
    x = jnp.tanh(_bn_train(lin(x, w("w12"), v("b12")), v("g1"), v("be1")))
    x = x + td1

    # --- block 2
    x = jnp.tanh(lin(x, w("w21"), v("b21")))
    x = jnp.tanh(_bn_train(lin(x, w("w22"), v("b22")), v("g2"), v("be2")))
    x = x + td2

    # --- head
    x = jnp.tanh(lin(x, w("w23"), v("b23")))
    out_ref[...] = lin(x, w("wf"), v("bf"))


def init_params(key):
    """Deterministic PyTorch-Linear-style init: U(-1/sqrt(fan_in), 1/sqrt(fan_in))."""
    def linear(k, fan_in, fan_out):
        k1, k2 = jax.random.split(k)
        bound = 1.0 / np.sqrt(fan_in)
        w = jax.random.uniform(k1, (fan_in, fan_out), jnp.float32, -bound, bound)
        b = jax.random.uniform(k2, (1, fan_out), jnp.float32, -bound, bound)
        return [w, b]

    keys = jax.random.split(key, 13)
    p = []
    p += linear(keys[0], DIM, TIME_EMBED_DIM)               # time_mlp Linear 1
    p += linear(keys[1], TIME_EMBED_DIM, TIME_EMBED_DIM)    # time_mlp Linear 2
    p += linear(keys[2], INPUT_DIM, HIDDEN)                 # C01
    p += linear(keys[3], HIDDEN, HIDDEN)                    # C02
    p += linear(keys[4], TIME_EMBED_DIM, HIDDEN)            # time_dep0
    p += [jnp.ones((1, HIDDEN), jnp.float32), jnp.zeros((1, HIDDEN), jnp.float32)]   # B01
    p += linear(keys[5], HIDDEN, WIDTH2)                    # C11
    p += linear(keys[6], WIDTH2, WIDTH2)                    # C12
    p += linear(keys[7], TIME_EMBED_DIM, WIDTH2)            # time_dep1
    p += [jnp.ones((1, WIDTH2), jnp.float32), jnp.zeros((1, WIDTH2), jnp.float32)]   # B11
    p += linear(keys[8], WIDTH2, WIDTH3)                    # C21
    p += linear(keys[9], WIDTH3, WIDTH3)                    # C22
    p += linear(keys[10], TIME_EMBED_DIM, WIDTH3)           # time_dep2
    p += [jnp.ones((1, WIDTH3), jnp.float32), jnp.zeros((1, WIDTH3), jnp.float32)]   # B21
    p += linear(keys[11], WIDTH3, WIDTH3)                   # C23
    p += linear(keys[12], WIDTH3, 2)                        # final01
    return p


def pack_params(params):
    """Host-side, once: pack the 32 PyTorch-style tensors into 3 lane-aligned slabs."""
    (wt1, bt1, wt2, bt2,
     w01, b01, w02, b02, wtd0, btd0, g0, be0,
     w11, b11, w12, b12, wtd1, btd1, g1, be1,
     w21, b21, w22, b22, wtd2, btd2, g2, be2,
     w23, b23, wf, bf) = params
    f32 = jnp.float32

    # slab 0: time-MLP second layer + fused time-dep weights, lane-slot aligned, bf16
    wtd_fused = jnp.zeros((TIME_EMBED_DIM, TD_W_PAD), f32)
    wtd_fused = wtd_fused.at[:, TD_SLOT0:TD_SLOT0 + HIDDEN].set(wtd0)
    wtd_fused = wtd_fused.at[:, TD_SLOT1:TD_SLOT1 + WIDTH2].set(wtd1)
    wtd_fused = wtd_fused.at[:, TD_SLOT2:TD_SLOT2 + WIDTH3].set(wtd2)
    w256 = jnp.concatenate([wt2, wtd_fused], axis=1).astype(jnp.bfloat16)

    # slab 1: all small weights, rows zero-padded to 64, cols padded to 128-lane slots, bf16
    small = {"wt1": wt1, "w02": w02, "w11": w11, "w12": w12,
             "w21": w21, "w22": w22, "w23": w23, "wf": wf}
    cols = []
    for name, _, c in _WSMALL_ORDER:
        m = small[name]
        r = m.shape[0]
        if r < WSMALL_ROWS:
            m = jnp.concatenate(
                [m, jnp.zeros((WSMALL_ROWS - r, m.shape[1]), f32)], axis=0)
        slot = _pad_to(c)
        if c < slot:
            m = jnp.concatenate(
                [m, jnp.zeros((WSMALL_ROWS, slot - c), f32)], axis=1)
        cols.append(m)
    wsmall = jnp.concatenate(cols, axis=1).astype(jnp.bfloat16)

    # slab 2: all biases / BN affine params / rows of w01, one 128-lane slot per entry, f32
    btd_fused = jnp.zeros((1, TD_W_PAD), f32)
    btd_fused = btd_fused.at[:, TD_SLOT0:TD_SLOT0 + HIDDEN].set(btd0)
    btd_fused = btd_fused.at[:, TD_SLOT1:TD_SLOT1 + WIDTH2].set(btd1)
    btd_fused = btd_fused.at[:, TD_SLOT2:TD_SLOT2 + WIDTH3].set(btd2)
    pieces = {"bt1": bt1, "bt2": bt2, "b01": b01, "b02": b02,
              "btd": btd_fused,
              "g0": g0, "be0": be0,
              "b11": b11, "b12": b12, "g1": g1, "be1": be1,
              "b21": b21, "b22": b22, "g2": g2, "be2": be2,
              "b23": b23, "bf": bf,
              "w01r0": w01[0:1, :], "w01r1": w01[1:2, :]}
    vparts = []
    for name, size in _VEC_ORDER:
        row = pieces[name].reshape(1, -1).astype(f32)
        slot = _pad_to(size)
        if row.shape[1] < slot:
            row = jnp.concatenate(
                [row, jnp.zeros((1, slot - row.shape[1]), f32)], axis=1)
        vparts.append(row)
    vec = jnp.concatenate(vparts, axis=1)

    assert w256.shape == (TIME_EMBED_DIM, TIME_EMBED_DIM + TD_W_PAD)
    assert wsmall.shape == (WSMALL_ROWS, WSMALL_W)
    assert vec.shape == (1, VEC_LEN)
    return (w256, wsmall, vec)


def noise_model_forward(packed_params, inputdata, time, labels=None):
    # `labels` is accepted but unused, exactly like the PyTorch forward.
    B = inputdata.shape[0]
    w256, wsmall, vec = packed_params
    x = inputdata.astype(jnp.float32)                       # (B, 2), passed through untouched
    t2 = time.astype(jnp.float32).reshape(B, 1)             # (B, 1)

    return pl.pallas_call(
        noise_model_kernel,
        out_shape=jax.ShapeDtypeStruct((B, 2), jnp.float32),
        in_specs=[pl.BlockSpec(memory_space=pltpu.MemorySpace.VMEM)] * 5,
        out_specs=pl.BlockSpec(memory_space=pltpu.MemorySpace.VMEM),
    )(x, t2, w256, wsmall, vec)


if __name__ == "__main__":
    key = jax.random.PRNGKey(0)
    k_param, k_x, k_t = jax.random.split(key, 3)

    B = 8
    params = init_params(k_param)
    packed = pack_params(params)          # packed once, outside the jitted forward
    inputdata = jax.random.normal(k_x, (B, INPUT_DIM), jnp.float32)
    time = jax.random.randint(k_t, (B,), 0, 1000).astype(jnp.float32)
    labels = jnp.zeros((B,), jnp.int32)   # unused by the forward

    fwd = jax.jit(noise_model_forward)
    out = fwd(packed, inputdata, time, labels)
    jax.block_until_ready(out)
    assert out.shape == (B, 2) and out.dtype == jnp.float32
    assert bool(jnp.all(jnp.isfinite(out)))
    print("KERNEL_OK")
</pallas_src>

<mosaic_0001>
module attributes {stable_mosaic.version = 11 : i64} {
  func.func @noise_model_kernel(%arg0: memref<8x2xf32, #tpu.memory_space<vmem>>, %arg1: memref<8x1xf32, #tpu.memory_space<vmem>>, %arg2: memref<256x640xbf16, #tpu.memory_space<vmem>>, %arg3: memref<64x1152xbf16, #tpu.memory_space<vmem>>, %arg4: memref<1x2944xf32, #tpu.memory_space<vmem>>, %arg5: memref<8x2xf32, #tpu.memory_space<vmem>>) attributes {dimension_semantics = [], scalar_prefetch = 0 : i64, scratch_operands = 0 : i64, tpu.core_type = #tpu.core_type<tc>} {
    %c0 = arith.constant 0 : index
    %c0_0 = arith.constant 0 : index
    %0 = vector.load %arg0[%c0, %c0_0] : memref<8x2xf32, #tpu.memory_space<vmem>>, vector<8x2xf32>
    %c0_1 = arith.constant 0 : index
    %c0_2 = arith.constant 0 : index
    %1 = vector.load %arg1[%c0_1, %c0_2] : memref<8x1xf32, #tpu.memory_space<vmem>>, vector<8x1xf32>
    %2 = tpu.iota {dimensions = array<i32: 1>} : vector<1x64xi32>
    %c32_i32 = arith.constant 32 : i32
    %3 = vector.broadcast %c32_i32 : i32 to vector<1x64xi32>
    %4 = arith.cmpi sge, %2, %3 : vector<1x64xi32>
    %c32_i32_3 = arith.constant 32 : i32
    %5 = vector.broadcast %c32_i32_3 : i32 to vector<1x64xi32>
    %6 = arith.subi %2, %5 : vector<1x64xi32>
    %7 = arith.select %4, %6, %2 : vector<1x64xi1>, vector<1x64xi32>
    %8 = arith.sitofp %7 : vector<1x64xi32> to vector<1x64xf32>
    %cst = arith.constant -0.297107756 : f32
    %9 = vector.broadcast %cst : f32 to vector<1x64xf32>
    %10 = arith.mulf %8, %9 : vector<1x64xf32>
    %11 = math.exp %10 : vector<1x64xf32>
    %cst_4 = arith.constant 1.57079637 : f32
    %cst_5 = arith.constant 0.000000e+00 : f32
    %12 = vector.broadcast %cst_4 : f32 to vector<1x64xf32>
    %13 = vector.broadcast %cst_5 : f32 to vector<1x64xf32>
    %14 = arith.select %4, %12, %13 : vector<1x64xi1>, vector<1x64xf32>
    %15 = vector.broadcast %1 : vector<8x1xf32> to vector<8x64xf32>
    %16 = vector.broadcast %11 : vector<1x64xf32> to vector<8x64xf32>
    %17 = arith.mulf %15, %16 : vector<8x64xf32>
    %18 = vector.broadcast %14 : vector<1x64xf32> to vector<8x64xf32>
    %19 = arith.addf %17, %18 : vector<8x64xf32>
    %20 = math.sin %19 : vector<8x64xf32>
    %c0_6 = arith.constant 0 : index
    %c0_7 = arith.constant 0 : index
    %21 = vector.load %arg3[%c0_6, %c0_7] : memref<64x1152xbf16, #tpu.memory_space<vmem>>, vector<64x256xbf16>
    %c0_8 = arith.constant 0 : index
    %c0_9 = arith.constant 0 : index
    %22 = vector.load %arg4[%c0_8, %c0_9] : memref<1x2944xf32, #tpu.memory_space<vmem>>, vector<1x256xf32>
    %23 = arith.truncf %20 : vector<8x64xf32> to vector<8x64xbf16>
    %cst_10 = arith.constant dense<0.000000e+00> : vector<8x256xf32>
    %24 = tpu.matmul %23, %21, %cst_10 {dimension_numbers = #tpu.dot_dimension_numbers<[1], [0], [0], [1], [0, 0, 1, 1], [], []>} : vector<8x64xbf16>, vector<64x256xbf16>, vector<8x256xf32> -> vector<8x256xf32>
    %25 = vector.broadcast %22 : vector<1x256xf32> to vector<8x256xf32>
    %26 = arith.addf %24, %25 : vector<8x256xf32>
    %cst_11 = arith.constant 5.000000e-01 : f32
    %27 = vector.broadcast %cst_11 : f32 to vector<8x256xf32>
    %28 = arith.mulf %27, %26 : vector<8x256xf32>
    %cst_12 = arith.constant 0.707106769 : f32
    %29 = vector.broadcast %cst_12 : f32 to vector<8x256xf32>
    %30 = arith.mulf %26, %29 : vector<8x256xf32>
    %31 = math.erf %30 : vector<8x256xf32>
    %cst_13 = arith.constant 1.000000e+00 : f32
    %32 = vector.broadcast %cst_13 : f32 to vector<8x256xf32>
    %33 = arith.addf %32, %31 : vector<8x256xf32>
    %34 = arith.mulf %28, %33 : vector<8x256xf32>
    %c0_14 = arith.constant 0 : index
    %c0_15 = arith.constant 0 : index
    %35 = vector.load %arg2[%c0_14, %c0_15] : memref<256x640xbf16, #tpu.memory_space<vmem>>, vector<256x256xbf16>
    %c0_16 = arith.constant 0 : index
    %c256 = arith.constant 256 : index
    %36 = vector.load %arg4[%c0_16, %c256] : memref<1x2944xf32, #tpu.memory_space<vmem>>, vector<1x256xf32>
    %37 = arith.truncf %34 : vector<8x256xf32> to vector<8x256xbf16>
    %cst_17 = arith.constant dense<0.000000e+00> : vector<8x256xf32>
    %38 = tpu.matmul %37, %35, %cst_17 {dimension_numbers = #tpu.dot_dimension_numbers<[1], [0], [0], [1], [0, 0, 1, 1], [], []>} : vector<8x256xbf16>, vector<256x256xbf16>, vector<8x256xf32> -> vector<8x256xf32>
    %39 = vector.broadcast %36 : vector<1x256xf32> to vector<8x256xf32>
    %40 = arith.addf %38, %39 : vector<8x256xf32>
    %41 = arith.negf %40 : vector<8x256xf32>
    %42 = math.exp %41 : vector<8x256xf32>
    %cst_18 = arith.constant 1.000000e+00 : f32
    %43 = vector.broadcast %cst_18 : f32 to vector<8x256xf32>
    %44 = arith.addf %43, %42 : vector<8x256xf32>
    %45 = arith.divf %43, %44 : vector<8x256xf32>
    %46 = arith.mulf %40, %45 : vector<8x256xf32>
    %c0_19 = arith.constant 0 : index
    %c256_20 = arith.constant 256 : index
    %47 = vector.load %arg2[%c0_19, %c256_20] : memref<256x640xbf16, #tpu.memory_space<vmem>>, vector<256x384xbf16>
    %c0_21 = arith.constant 0 : index
    %c768 = arith.constant 768 : index
    %48 = vector.load %arg4[%c0_21, %c768] : memref<1x2944xf32, #tpu.memory_space<vmem>>, vector<1x384xf32>
    %49 = arith.truncf %46 : vector<8x256xf32> to vector<8x256xbf16>
    %cst_22 = arith.constant dense<0.000000e+00> : vector<8x384xf32>
    %50 = tpu.matmul %49, %47, %cst_22 {dimension_numbers = #tpu.dot_dimension_numbers<[1], [0], [0], [1], [0, 0, 1, 1], [], []>} : vector<8x256xbf16>, vector<256x384xbf16>, vector<8x384xf32> -> vector<8x384xf32>
    %51 = vector.broadcast %48 : vector<1x384xf32> to vector<8x384xf32>
    %52 = arith.addf %50, %51 : vector<8x384xf32>
    %53 = vector.extract_strided_slice %52 {offsets = [0, 0], sizes = [8, 64], strides = [1, 1]} : vector<8x384xf32> to vector<8x64xf32>
    %54 = vector.extract_strided_slice %52 {offsets = [0, 128], sizes = [8, 32], strides = [1, 1]} : vector<8x384xf32> to vector<8x32xf32>
    %55 = vector.extract_strided_slice %52 {offsets = [0, 256], sizes = [8, 16], strides = [1, 1]} : vector<8x384xf32> to vector<8x16xf32>
    %56 = vector.extract_strided_slice %0 {offsets = [0, 0], sizes = [8, 1], strides = [1, 1]} : vector<8x2xf32> to vector<8x1xf32>
    %c0_23 = arith.constant 0 : index
    %c2688 = arith.constant 2688 : index
    %57 = vector.load %arg4[%c0_23, %c2688] : memref<1x2944xf32, #tpu.memory_space<vmem>>, vector<1x64xf32>
    %58 = vector.broadcast %56 : vector<8x1xf32> to vector<8x64xf32>
    %59 = vector.broadcast %57 : vector<1x64xf32> to vector<8x64xf32>
    %60 = arith.mulf %58, %59 : vector<8x64xf32>
    %61 = vector.extract_strided_slice %0 {offsets = [0, 1], sizes = [8, 1], strides = [1, 1]} : vector<8x2xf32> to vector<8x1xf32>
    %c0_24 = arith.constant 0 : index
    %c2816 = arith.constant 2816 : index
    %62 = vector.load %arg4[%c0_24, %c2816] : memref<1x2944xf32, #tpu.memory_space<vmem>>, vector<1x64xf32>
    %63 = vector.broadcast %61 : vector<8x1xf32> to vector<8x64xf32>
    %64 = vector.broadcast %62 : vector<1x64xf32> to vector<8x64xf32>
    %65 = arith.mulf %63, %64 : vector<8x64xf32>
    %66 = arith.addf %60, %65 : vector<8x64xf32>
    %c0_25 = arith.constant 0 : index
    %c512 = arith.constant 512 : index
    %67 = vector.load %arg4[%c0_25, %c512] : memref<1x2944xf32, #tpu.memory_space<vmem>>, vector<1x64xf32>
    %68 = vector.broadcast %67 : vector<1x64xf32> to vector<8x64xf32>
    %69 = arith.addf %66, %68 : vector<8x64xf32>
    %70 = math.tanh %69 : vector<8x64xf32>
    %c0_26 = arith.constant 0 : index
    %c256_27 = arith.constant 256 : index
    %71 = vector.load %arg3[%c0_26, %c256_27] : memref<64x1152xbf16, #tpu.memory_space<vmem>>, vector<64x64xbf16>
    %c0_28 = arith.constant 0 : index
    %c640 = arith.constant 640 : index
    %72 = vector.load %arg4[%c0_28, %c640] : memref<1x2944xf32, #tpu.memory_space<vmem>>, vector<1x64xf32>
    %73 = arith.truncf %70 : vector<8x64xf32> to vector<8x64xbf16>
    %cst_29 = arith.constant dense<0.000000e+00> : vector<8x64xf32>
    %74 = tpu.matmul %73, %71, %cst_29 {dimension_numbers = #tpu.dot_dimension_numbers<[1], [0], [0], [1], [0, 0, 1, 1], [], []>} : vector<8x64xbf16>, vector<64x64xbf16>, vector<8x64xf32> -> vector<8x64xf32>
    %75 = vector.broadcast %72 : vector<1x64xf32> to vector<8x64xf32>
    %76 = arith.addf %74, %75 : vector<8x64xf32>
    %c0_30 = arith.constant 0 : index
    %c1152 = arith.constant 1152 : index
    %77 = vector.load %arg4[%c0_30, %c1152] : memref<1x2944xf32, #tpu.memory_space<vmem>>, vector<1x64xf32>
    %c0_31 = arith.constant 0 : index
    %c1280 = arith.constant 1280 : index
    %78 = vector.load %arg4[%c0_31, %c1280] : memref<1x2944xf32, #tpu.memory_space<vmem>>, vector<1x64xf32>
    %cst_32 = arith.constant dense<0.000000e+00> : vector<64xf32>
    %79 = vector.multi_reduction <add>, %76, %cst_32 [0] : vector<8x64xf32> to vector<64xf32>
    %80 = vector.shape_cast %79 : vector<64xf32> to vector<1x64xf32>
    %cst_33 = arith.constant 8.000000e+00 : f32
    %81 = vector.broadcast %cst_33 : f32 to vector<1x64xf32>
    %82 = arith.divf %80, %81 : vector<1x64xf32>
    %83 = arith.mulf %76, %76 : vector<8x64xf32>
    %cst_34 = arith.constant dense<0.000000e+00> : vector<64xf32>
    %84 = vector.multi_reduction <add>, %83, %cst_34 [0] : vector<8x64xf32> to vector<64xf32>
    %85 = vector.shape_cast %84 : vector<64xf32> to vector<1x64xf32>
    %cst_35 = arith.constant 8.000000e+00 : f32
    %86 = vector.broadcast %cst_35 : f32 to vector<1x64xf32>
    %87 = arith.divf %85, %86 : vector<1x64xf32>
    %88 = arith.mulf %82, %82 : vector<1x64xf32>
    %89 = arith.subf %87, %88 : vector<1x64xf32>
    %cst_36 = arith.constant 0.000000e+00 : f32
    %90 = vector.broadcast %cst_36 : f32 to vector<1x64xf32>
    %91 = arith.maximumf %89, %90 : vector<1x64xf32>
    %92 = vector.broadcast %82 : vector<1x64xf32> to vector<8x64xf32>
    %93 = arith.subf %76, %92 : vector<8x64xf32>
    %cst_37 = arith.constant 9.99999974E-6 : f32
    %94 = vector.broadcast %cst_37 : f32 to vector<1x64xf32>
    %95 = arith.addf %91, %94 : vector<1x64xf32>
    %96 = math.rsqrt %95 : vector<1x64xf32>
    %97 = vector.broadcast %96 : vector<1x64xf32> to vector<8x64xf32>
    %98 = arith.mulf %93, %97 : vector<8x64xf32>
    %99 = vector.broadcast %77 : vector<1x64xf32> to vector<8x64xf32>
    %100 = arith.mulf %98, %99 : vector<8x64xf32>
    %101 = vector.broadcast %78 : vector<1x64xf32> to vector<8x64xf32>
    %102 = arith.addf %100, %101 : vector<8x64xf32>
    %103 = math.tanh %102 : vector<8x64xf32>
    %104 = arith.addf %103, %53 : vector<8x64xf32>
    %c0_38 = arith.constant 0 : index
    %c384 = arith.constant 384 : index
    %105 = vector.load %arg3[%c0_38, %c384] : memref<64x1152xbf16, #tpu.memory_space<vmem>>, vector<64x32xbf16>
    %c0_39 = arith.constant 0 : index
    %c1408 = arith.constant 1408 : index
    %106 = vector.load %arg4[%c0_39, %c1408] : memref<1x2944xf32, #tpu.memory_space<vmem>>, vector<1x32xf32>
    %107 = arith.truncf %104 : vector<8x64xf32> to vector<8x64xbf16>
    %cst_40 = arith.constant dense<0.000000e+00> : vector<8x32xf32>
    %108 = tpu.matmul %107, %105, %cst_40 {dimension_numbers = #tpu.dot_dimension_numbers<[1], [0], [0], [1], [0, 0, 1, 1], [], []>} : vector<8x64xbf16>, vector<64x32xbf16>, vector<8x32xf32> -> vector<8x32xf32>
    %109 = vector.broadcast %106 : vector<1x32xf32> to vector<8x32xf32>
    %110 = arith.addf %108, %109 : vector<8x32xf32>
    %111 = math.tanh %110 : vector<8x32xf32>
    %c0_41 = arith.constant 0 : index
    %c512_42 = arith.constant 512 : index
    %112 = vector.load %arg3[%c0_41, %c512_42] : memref<64x1152xbf16, #tpu.memory_space<vmem>>, vector<32x32xbf16>
    %c0_43 = arith.constant 0 : index
    %c1536 = arith.constant 1536 : index
    %113 = vector.load %arg4[%c0_43, %c1536] : memref<1x2944xf32, #tpu.memory_space<vmem>>, vector<1x32xf32>
    %114 = arith.truncf %111 : vector<8x32xf32> to vector<8x32xbf16>
    %cst_44 = arith.constant dense<0.000000e+00> : vector<8x32xf32>
    %115 = tpu.matmul %114, %112, %cst_44 {dimension_numbers = #tpu.dot_dimension_numbers<[1], [0], [0], [1], [0, 0, 1, 1], [], []>} : vector<8x32xbf16>, vector<32x32xbf16>, vector<8x32xf32> -> vector<8x32xf32>
    %116 = vector.broadcast %113 : vector<1x32xf32> to vector<8x32xf32>
    %117 = arith.addf %115, %116 : vector<8x32xf32>
    %c0_45 = arith.constant 0 : index
    %c1664 = arith.constant 1664 : index
    %118 = vector.load %arg4[%c0_45, %c1664] : memref<1x2944xf32, #tpu.memory_space<vmem>>, vector<1x32xf32>
    %c0_46 = arith.constant 0 : index
    %c1792 = arith.constant 1792 : index
    %119 = vector.load %arg4[%c0_46, %c1792] : memref<1x2944xf32, #tpu.memory_space<vmem>>, vector<1x32xf32>
    %cst_47 = arith.constant dense<0.000000e+00> : vector<32xf32>
    %120 = vector.multi_reduction <add>, %117, %cst_47 [0] : vector<8x32xf32> to vector<32xf32>
    %121 = vector.shape_cast %120 : vector<32xf32> to vector<1x32xf32>
    %cst_48 = arith.constant 8.000000e+00 : f32
    %122 = vector.broadcast %cst_48 : f32 to vector<1x32xf32>
    %123 = arith.divf %121, %122 : vector<1x32xf32>
    %124 = arith.mulf %117, %117 : vector<8x32xf32>
    %cst_49 = arith.constant dense<0.000000e+00> : vector<32xf32>
    %125 = vector.multi_reduction <add>, %124, %cst_49 [0] : vector<8x32xf32> to vector<32xf32>
    %126 = vector.shape_cast %125 : vector<32xf32> to vector<1x32xf32>
    %cst_50 = arith.constant 8.000000e+00 : f32
    %127 = vector.broadcast %cst_50 : f32 to vector<1x32xf32>
    %128 = arith.divf %126, %127 : vector<1x32xf32>
    %129 = arith.mulf %123, %123 : vector<1x32xf32>
    %130 = arith.subf %128, %129 : vector<1x32xf32>
    %cst_51 = arith.constant 0.000000e+00 : f32
    %131 = vector.broadcast %cst_51 : f32 to vector<1x32xf32>
    %132 = arith.maximumf %130, %131 : vector<1x32xf32>
    %133 = vector.broadcast %123 : vector<1x32xf32> to vector<8x32xf32>
    %134 = arith.subf %117, %133 : vector<8x32xf32>
    %cst_52 = arith.constant 9.99999974E-6 : f32
    %135 = vector.broadcast %cst_52 : f32 to vector<1x32xf32>
    %136 = arith.addf %132, %135 : vector<1x32xf32>
    %137 = math.rsqrt %136 : vector<1x32xf32>
    %138 = vector.broadcast %137 : vector<1x32xf32> to vector<8x32xf32>
    %139 = arith.mulf %134, %138 : vector<8x32xf32>
    %140 = vector.broadcast %118 : vector<1x32xf32> to vector<8x32xf32>
    %141 = arith.mulf %139, %140 : vector<8x32xf32>
    %142 = vector.broadcast %119 : vector<1x32xf32> to vector<8x32xf32>
    %143 = arith.addf %141, %142 : vector<8x32xf32>
    %144 = math.tanh %143 : vector<8x32xf32>
    %145 = arith.addf %144, %54 : vector<8x32xf32>
    %c0_53 = arith.constant 0 : index
    %c640_54 = arith.constant 640 : index
    %146 = vector.load %arg3[%c0_53, %c640_54] : memref<64x1152xbf16, #tpu.memory_space<vmem>>, vector<32x16xbf16>
    %c0_55 = arith.constant 0 : index
    %c1920 = arith.constant 1920 : index
    %147 = vector.load %arg4[%c0_55, %c1920] : memref<1x2944xf32, #tpu.memory_space<vmem>>, vector<1x16xf32>
    %148 = arith.truncf %145 : vector<8x32xf32> to vector<8x32xbf16>
    %cst_56 = arith.constant dense<0.000000e+00> : vector<8x16xf32>
    %149 = tpu.matmul %148, %146, %cst_56 {dimension_numbers = #tpu.dot_dimension_numbers<[1], [0], [0], [1], [0, 0, 1, 1], [], []>} : vector<8x32xbf16>, vector<32x16xbf16>, vector<8x16xf32> -> vector<8x16xf32>
    %150 = vector.broadcast %147 : vector<1x16xf32> to vector<8x16xf32>
    %151 = arith.addf %149, %150 : vector<8x16xf32>
    %152 = math.tanh %151 : vector<8x16xf32>
    %c0_57 = arith.constant 0 : index
    %c768_58 = arith.constant 768 : index
    %153 = vector.load %arg3[%c0_57, %c768_58] : memref<64x1152xbf16, #tpu.memory_space<vmem>>, vector<16x16xbf16>
    %c0_59 = arith.constant 0 : index
    %c2048 = arith.constant 2048 : index
    %154 = vector.load %arg4[%c0_59, %c2048] : memref<1x2944xf32, #tpu.memory_space<vmem>>, vector<1x16xf32>
    %155 = arith.truncf %152 : vector<8x16xf32> to vector<8x16xbf16>
    %cst_60 = arith.constant dense<0.000000e+00> : vector<8x16xf32>
    %156 = tpu.matmul %155, %153, %cst_60 {dimension_numbers = #tpu.dot_dimension_numbers<[1], [0], [0], [1], [0, 0, 1, 1], [], []>} : vector<8x16xbf16>, vector<16x16xbf16>, vector<8x16xf32> -> vector<8x16xf32>
    %157 = vector.broadcast %154 : vector<1x16xf32> to vector<8x16xf32>
    %158 = arith.addf %156, %157 : vector<8x16xf32>
    %c0_61 = arith.constant 0 : index
    %c2176 = arith.constant 2176 : index
    %159 = vector.load %arg4[%c0_61, %c2176] : memref<1x2944xf32, #tpu.memory_space<vmem>>, vector<1x16xf32>
    %c0_62 = arith.constant 0 : index
    %c2304 = arith.constant 2304 : index
    %160 = vector.load %arg4[%c0_62, %c2304] : memref<1x2944xf32, #tpu.memory_space<vmem>>, vector<1x16xf32>
    %cst_63 = arith.constant dense<0.000000e+00> : vector<16xf32>
    %161 = vector.multi_reduction <add>, %158, %cst_63 [0] : vector<8x16xf32> to vector<16xf32>
    %162 = vector.shape_cast %161 : vector<16xf32> to vector<1x16xf32>
    %cst_64 = arith.constant 8.000000e+00 : f32
    %163 = vector.broadcast %cst_64 : f32 to vector<1x16xf32>
    %164 = arith.divf %162, %163 : vector<1x16xf32>
    %165 = arith.mulf %158, %158 : vector<8x16xf32>
    %cst_65 = arith.constant dense<0.000000e+00> : vector<16xf32>
    %166 = vector.multi_reduction <add>, %165, %cst_65 [0] : vector<8x16xf32> to vector<16xf32>
    %167 = vector.shape_cast %166 : vector<16xf32> to vector<1x16xf32>
    %cst_66 = arith.constant 8.000000e+00 : f32
    %168 = vector.broadcast %cst_66 : f32 to vector<1x16xf32>
    %169 = arith.divf %167, %168 : vector<1x16xf32>
    %170 = arith.mulf %164, %164 : vector<1x16xf32>
    %171 = arith.subf %169, %170 : vector<1x16xf32>
    %cst_67 = arith.constant 0.000000e+00 : f32
    %172 = vector.broadcast %cst_67 : f32 to vector<1x16xf32>
    %173 = arith.maximumf %171, %172 : vector<1x16xf32>
    %174 = vector.broadcast %164 : vector<1x16xf32> to vector<8x16xf32>
    %175 = arith.subf %158, %174 : vector<8x16xf32>
    %cst_68 = arith.constant 9.99999974E-6 : f32
    %176 = vector.broadcast %cst_68 : f32 to vector<1x16xf32>
    %177 = arith.addf %173, %176 : vector<1x16xf32>
    %178 = math.rsqrt %177 : vector<1x16xf32>
    %179 = vector.broadcast %178 : vector<1x16xf32> to vector<8x16xf32>
    %180 = arith.mulf %175, %179 : vector<8x16xf32>
    %181 = vector.broadcast %159 : vector<1x16xf32> to vector<8x16xf32>
    %182 = arith.mulf %180, %181 : vector<8x16xf32>
    %183 = vector.broadcast %160 : vector<1x16xf32> to vector<8x16xf32>
    %184 = arith.addf %182, %183 : vector<8x16xf32>
    %185 = math.tanh %184 : vector<8x16xf32>
    %186 = arith.addf %185, %55 : vector<8x16xf32>
    %c0_69 = arith.constant 0 : index
    %c896 = arith.constant 896 : index
    %187 = vector.load %arg3[%c0_69, %c896] : memref<64x1152xbf16, #tpu.memory_space<vmem>>, vector<16x16xbf16>
    %c0_70 = arith.constant 0 : index
    %c2432 = arith.constant 2432 : index
    %188 = vector.load %arg4[%c0_70, %c2432] : memref<1x2944xf32, #tpu.memory_space<vmem>>, vector<1x16xf32>
    %189 = arith.truncf %186 : vector<8x16xf32> to vector<8x16xbf16>
    %cst_71 = arith.constant dense<0.000000e+00> : vector<8x16xf32>
    %190 = tpu.matmul %189, %187, %cst_71 {dimension_numbers = #tpu.dot_dimension_numbers<[1], [0], [0], [1], [0, 0, 1, 1], [], []>} : vector<8x16xbf16>, vector<16x16xbf16>, vector<8x16xf32> -> vector<8x16xf32>
    %191 = vector.broadcast %188 : vector<1x16xf32> to vector<8x16xf32>
    %192 = arith.addf %190, %191 : vector<8x16xf32>
    %193 = math.tanh %192 : vector<8x16xf32>
    %c0_72 = arith.constant 0 : index
    %c1024 = arith.constant 1024 : index
    %194 = vector.load %arg3[%c0_72, %c1024] : memref<64x1152xbf16, #tpu.memory_space<vmem>>, vector<16x2xbf16>
    %c0_73 = arith.constant 0 : index
    %c2560 = arith.constant 2560 : index
    %195 = vector.load %arg4[%c0_73, %c2560] : memref<1x2944xf32, #tpu.memory_space<vmem>>, vector<1x2xf32>
    %196 = arith.truncf %193 : vector<8x16xf32> to vector<8x16xbf16>
    %cst_74 = arith.constant dense<0.000000e+00> : vector<8x2xf32>
    %197 = tpu.matmul %196, %194, %cst_74 {dimension_numbers = #tpu.dot_dimension_numbers<[1], [0], [0], [1], [0, 0, 1, 1], [], []>} : vector<8x16xbf16>, vector<16x2xbf16>, vector<8x2xf32> -> vector<8x2xf32>
    %198 = vector.broadcast %195 : vector<1x2xf32> to vector<8x2xf32>
    %199 = arith.addf %197, %198 : vector<8x2xf32>
    %c0_75 = arith.constant 0 : index
    %c0_76 = arith.constant 0 : index
    %200 = vector.load %arg5[%c0_75, %c0_76] : memref<8x2xf32, #tpu.memory_space<vmem>>, vector<8x2xf32>
    tpu.vector_store %arg5[%c0_75, %c0_76], %199 {strides = array<i32>} : memref<8x2xf32, #tpu.memory_space<vmem>>, vector<8x2xf32>,
    return
  }
}

</mosaic_0001>

<llo_original>
// kernel: noise_model_forward.1
$region0: #{noise_model_forward.1}
  #allocation0 [shape = 'u32[]', space=smem, size = 0x4, offset = 0x4, fixed_abs, tag = 'smem constant byte address 0x4 - core index']
  #allocation1 [shape = 'u32[144,128]{1,0:T(1,128)}', space=vmem, size = 0x12000, scoped, tag = 'internal scratch']
  %s0 = inlined_call_operand.vmem [shape: f32[8,2], index: 0, kind: input, shape index: {}]
  %s1 = inlined_call_operand.vmem [shape: f32[8,1], index: 1, kind: input, shape index: {}]
  %s2 = inlined_call_operand.hbm [shape: bf16[256,640], index: 2, kind: input, shape index: {}]
  %s3 = inlined_call_operand.hbm [shape: bf16[64,1152], index: 3, kind: input, shape index: {}]
  %s4 = inlined_call_operand.vmem [shape: f32[1,2944], index: 4, kind: input, shape index: {}]
  %s5 = inlined_call_operand.vmem [shape: f32[8,2], index: 5, kind: output, shape index: {}]
  %s6 = sld [smem:[#allocation0]]
  $region38: #{noise_model_forward.1} parent=0
    _
  %s8 = ssub.s32 1, %s6
  %s9 = scalar_select 0, %s8, %s6
  $region1: #{noise_model_forward.1} parent=0
    #allocation2 [shape = 'u8[327680]{0}', space=vmem, size = 0x50000, scoped, tag = 'input window, operand 2, single buffered']
    #allocation3 [shape = 's32[1]{0}', space=sflag, size = 0x4, scoped, tag = 'scoped memory for noise_model_forward.1']
    #allocation4 [shape = 'u8[147456]{0}', space=vmem, size = 0x24000, scoped, tag = 'input window, operand 3, single buffered']
    #allocation5 [shape = 's32[1]{0}', space=sflag, size = 0x4, scoped, tag = 'scoped memory for noise_model_forward.1']
    %10 = vsyncpa [#allocation3], 0
    %11 = vsyncpa [#allocation5], 0
    // Predicated region
    $region2: #{noise_model_forward.1} parent=1 // pred_check
      _
    $region3: #{noise_model_forward.1} parent=1 // pred_check_branch
      %13 = sbr.rel (0) target = $region5
    $region4: #{noise_model_forward.1} parent=1 // pred_region
      _
    $region5: #{noise_model_forward.1} parent=1 // pred_fallthru
      _
    // Predicated region
    $region6: #{noise_model_forward.1} parent=1 // pred_check
      _
    $region7: #{noise_model_forward.1} parent=1 // pred_check_branch
      %15 = sbr.rel (0) target = $region9
    $region8: #{noise_model_forward.1} parent=1 // pred_region
      _
    $region9: #{noise_model_forward.1} parent=1 // pred_fallthru
      _
    // Predicated region
    $region10: #{noise_model_forward.1} parent=1 // pred_check
      _
    $region11: #{noise_model_forward.1} parent=1 // pred_check_branch
      %17 = sbr.rel (0) target = $region13
    $region12: #{noise_model_forward.1} parent=1 // pred_region
      %s19 = ssub.s32 10240, 10240
      %20 = vsyncadd [#allocation3], %s19
      %s21 = sshll.u32 [#allocation2], 4
      %s22 = int_to_ptr.vmem [resolvable:$true] %s21
      %27 = dma.hbm_to_vmem [thread:$0]  %s2, 10240, %s22, [#allocation3], 320, 320, 20
    $region13: #{noise_model_forward.1} parent=1 // pred_fallthru
      _
    // Predicated region
    $region14: #{noise_model_forward.1} parent=1 // pred_check
      _
    $region15: #{noise_model_forward.1} parent=1 // pred_check_branch
      %29 = sbr.rel (0) target = $region17
    $region16: #{noise_model_forward.1} parent=1 // pred_region
      %s31 = ssub.s32 4608, 4608
      %32 = vsyncadd [#allocation5], %s31
      %s33 = sshll.u32 [#allocation4], 4
      %s34 = int_to_ptr.vmem [resolvable:$true] %s33
      %39 = dma.hbm_to_vmem [thread:$0]  %s3, 4608, %s34, [#allocation5], 576, 576, 36
    $region17: #{noise_model_forward.1} parent=1 // pred_fallthru
      _
    // Predicated region
    $region18: #{noise_model_forward.1} parent=1 // pred_check
      _
    $region19: #{noise_model_forward.1} parent=1 // pred_check_branch
      %41 = sbr.rel (0) target = $region21
    $region20: #{noise_model_forward.1} parent=1 // pred_region
      _
    $region21: #{noise_model_forward.1} parent=1 // pred_fallthru
      _
    // Predicated region
    $region22: #{noise_model_forward.1} parent=1 // pred_check
      _
    $region23: #{noise_model_forward.1} parent=1 // pred_check_branch
      %43 = sbr.rel (0) target = $region25
    $region24: #{noise_model_forward.1} parent=1 // pred_region
      %44 = dma.done [#allocation3], 10240
    $region25: #{noise_model_forward.1} parent=1 // pred_fallthru
      _
    // Predicated region
    $region26: #{noise_model_forward.1} parent=1 // pred_check
      _
    $region27: #{noise_model_forward.1} parent=1 // pred_check_branch
      %46 = sbr.rel (0) target = $region29
    $region28: #{noise_model_forward.1} parent=1 // pred_region
      %47 = dma.done [#allocation5], 4608
    $region29: #{noise_model_forward.1} parent=1 // pred_fallthru
      _
    %v49 = vld [vmem:[%s0] sm:$0xff]
    %v50 = vld [vmem:[%s1] sm:$0xff]
    %v51 = vlaneseq
    %v52 = vand.u32 %v51, 127
    %vm53 = vcmp.ge.s32.totalorder %v52, 32
    %v54 = vsub.s32 %v52, 32
    %v55 = vsel %vm53, %v54, %v52
    %v56 = vcvt.s32.f32 %v55
    %v57 = vmul.f32 %v56, -0.29710776
    %v58 = vmul.f32 %v57, 1.442695
    %v59 = vpow.pop %v58
    %v60 = vsel %vm53, 1.5707964, 0.0
    %62 = vset.pattern.permute.xlu0 0
    %63 = vperm.xlu0 %62, %v50
    %v64 = vpop.permute.xlu0 %63
    %v66 = vmul.f32 %v64, %v59
    %v67 = vadd.f32 %v66, %v60
    %v68 = vand.u32 2147483647, %v67
    %vm69 = vcmp.le.f32.partialorder %v68, 0.7853982
    %vm70 = vcmp.lt.s32.totalorder %v67, 0
    %v71 = vand.u32 %v67, 2139095040
    %v72 = vshrl.u32 %v71, 23
    %v73 = vsub.s32 %v72, 127
    %v74 = vand.u32 2147483647, %v67
    %v75 = vand.u32 %v74, 8388607
    %v76 = vor.u32 %v75, 8388608
    %v77 = vsub.s32 0, %v76
    %v78 = vadd.s32 %v73, 1
    %vm79 = vcmp.gt.s32.totalorder %v78, 0
    %v80 = vsel %vm79, %v78, 0
    %v81 = vshrl.u32 %v80, 5
    %v82 = vand.u32 %v80, 31
    %v83 = vsub.s32 32, %v82
    %v84 = vshrl.u32 683565275, %v83
    %v85 = vshll.u32 683565275, %v82
    %v86 = vshrl.u32 2475754826, %v83
    %v87 = vor.u32 %v85, %v86
    %v88 = vshll.u32 2475754826, %v82
    %v89 = vshrl.u32 2131351028, %v83
    %v90 = vor.u32 %v88, %v89
    %v91 = vshll.u32 2131351028, %v82
    %v92 = vshrl.u32 2102212464, %v83
    %v93 = vor.u32 %v91, %v92
    %v94 = vshll.u32 2102212464, %v82
    %v95 = vshrl.u32 920167782, %v83
    %v96 = vor.u32 %v94, %v95
    %v97 = vshll.u32 920167782, %v82
    %v98 = vshrl.u32 1326507024, %v83
    %v99 = vor.u32 %v97, %v98
    %vm100 = vcmp.lt.s32.totalorder %v81, 1
    %vm101 = vcmp.lt.s32.totalorder %v81, 2
    %vm102 = vcmp.lt.s32.totalorder %v81, 3
    %vm103 = vcmp.lt.s32.totalorder %v81, 4
    %v104 = vsel %vm100, %v84, %v87
    %v105 = vsel %vm103, %v93, 2102212464
    %v106 = vsel %vm102, %v90, %v105
    %v107 = vsel %vm101, %v104, %v106
    %v108 = vsel %vm100, %v87, %v90
    %v109 = vsel %vm103, %v96, 920167782
    %v110 = vsel %vm102, %v93, %v109
    %v111 = vsel %vm101, %v108, %v110
    %v112 = vsel %vm100, %v90, %v93
    %v113 = vsel %vm103, %v99, 1326507024
    %v114 = vsel %vm102, %v96, %v113
    %v115 = vsel %vm101, %v112, %v114
    %v116 = vshll.u32 %v76, 8
    %v117 = vmul.u32.u64.compose %v116, %v115
    %v118 = vextract.low.u32 %v117
    %v119 = vextract.high.u32 %v117
    %v120 = vmul.u32.u64.compose %v116, %v111
    %v121 = vextract.low.u32 %v120
    %v122 = vextract.high.u32 %v120
    %v123 = vmul.u32 %v116, %v107
    %v124 = vadd.s32 %v119, %v121
    %vm125 = vc.u32 %v119, %v121
    %v126 = vadd.s32 %v122, 1
    %v127 = vsel %vm125, %v126, %v122
    %v128 = vadd.s32 %v123, %v127
    %v129 = vadd.s32 %v128, 536870912
    %v130 = vshrl.u32 %v129, 30
    %v131 = vshll.u32 %v130, 30
    %v132 = vsub.s32 %v128, %v131
    %vm133 = vcmp.lt.s32.totalorder %v132, 0
    %v134 = vsub.s32 0, %v132
    %v135 = vsel %vm133, %v134, %v132
    %v136 = vclz %v135
    %v137 = vsub.s32 %v136, 2
    %vm138 = vcmp.gt.s32.totalorder 0, %v137
    %v139 = vsel %vm138, 0, %v137
    %v140 = vsub.s32 32, %v139
    %v141 = vshll.u32 %v132, %v139
    %v142 = vshrl.u32 %v124, %v140
    %v143 = vor.u32 %v141, %v142
    %v144 = vsub.s32 4294967266, %v139
    %v145 = vadd.s32 %v144, 127
    %v146 = vshll.u32 %v145, 23
    %v147 = vor.u32 4788187, %v146
    %v148 = vand.u32 2147483647, %v147
    %v150 = vcvt.s32.f32 %v143
    %v151 = vmul.f32 %v150, %v148
    %v152 = vxor.u32 %v151, 2147483648
    %v153 = vsel %vm70, %v152, %v151
    %v154 = vsub.s32 4, %v130
    %v155 = vsel %vm70, %v154, %v130
    %v156 = vsel %vm69, %v67, %v153
    %v157 = vsel %vm69, 0, %v155
    %v158 = vcosq.f32.pop %v156
    %v159 = vsinq.f32.pop %v156
    %vm160 = vweird.f32 %v67
    %v161 = vadd.s32 %v157, 3
    %v162 = vand.u32 %v161, 3
    %vm163 = vcmp.lt.s32.totalorder %v162, 2
    %vm164 = vcmp.eq.s32.totalorder %v162, 0
    %v165 = vxor.u32 %v159, 2147483648
    %v166 = vsel %vm164, %v158, %v165
    %vm167 = vcmp.eq.s32.totalorder %v162, 2
    %v168 = vxor.u32 %v158, 2147483648
    %v169 = vsel %vm167, %v168, %v159
    %v170 = vsel %vm163, %v166, %v169
    %v171 = vsel %vm160, nan, %v170
    %v172 = vld [vmem:[#allocation4] sm:$0xff]
    %v173 = vld [vmem:[#allocation4 + $0x24] sm:$0xff]
    %v174 = vld [vmem:[#allocation4 + $0x48] sm:$0xff]
    %v175 = vld [vmem:[#allocation4 + $0x6c] sm:$0xff]
    %v176 = vld [vmem:[#allocation4 + $0x90] sm:$0xff]
    %v177 = vld [vmem:[#allocation4 + $0xb4] sm:$0xff]
    %v178 = vld [vmem:[#allocation4 + $0xd8] sm:$0xff]
    %v179 = vld [vmem:[#allocation4 + $0xfc] sm:$0xff]
    %v180 = vld [vmem:[%s4] sm:$0x3]
    %v181 = vpack.c.bf16 %v171, %v171
    %v183 = vlaneseq
    %v184 = vshrl.u32 %v183, 7
    %v185 = vsub.s32 0, %v184
    %v186 = vrot.slane %v180, %v185
    %v187 = vlaneseq
    %v188 = vshrl.u32 %v187, 7
    %v189 = vsub.s32 1, %v188
    %v190 = vrot.slane %v180, %v189
    %v201 = vunpack.c.l.b16 %v172
    %v202 = vunpack.c.h.b16 %v172
    %v203 = vunpack.c.l.b16 %v173
    %v204 = vunpack.c.h.b16 %v173
    %v205 = vunpack.c.l.b16 %v174
    %v206 = vunpack.c.h.b16 %v174
    %v207 = vunpack.c.l.b16 %v175
    %v208 = vunpack.c.h.b16 %v175
    %v209 = vunpack.c.l.b16 %v176
    %v210 = vunpack.c.h.b16 %v176
    %v211 = vunpack.c.l.b16 %v177
    %v212 = vunpack.c.h.b16 %v177
    %v213 = vunpack.c.l.b16 %v178
    %v214 = vunpack.c.h.b16 %v178
    %v215 = vunpack.c.l.b16 %v179
    %v216 = vunpack.c.h.b16 %v179
    %v217 = vpack.c.b16 %v203, %v201
    %v218 = vpack.c.b16 %v204, %v202
    %v219 = vpack.c.b16 %v207, %v205
    %v220 = vpack.c.b16 %v208, %v206
    %v221 = vpack.c.b16 %v211, %v209
    %v222 = vpack.c.b16 %v212, %v210
    %v223 = vpack.c.b16 %v215, %v213
    %v224 = vpack.c.b16 %v216, %v214
    %vm233 = vcmask 523264
    %v235 = vsel %vm233, %v181, 0
    %237 = vmatprep.subr.bf16.mxu0 %v218
    %238 = vmatpush1.bf16.msra.mxu0 %v217
    %239 = vmatprep.subr.bf16.mxu0 %v220
    %240 = vmatpush1.bf16.msra.mxu0 %v219
    %241 = vmatprep.subr.bf16.mxu0 %v222
    %242 = vmatpush1.bf16.msra.mxu0 %v221
    %243 = vmatprep.subr.bf16.mxu0 %v224
    %244 = vmatpush1.bf16.msra.mxu0 %v223
    %245 = vmatprep.subr.bf16.mxu0 0
    %246 = vmatpush1.bf16.msra.mxu0 0
    %247 = vmatprep.subr.bf16.mxu0 0
    %248 = vmatpush1.bf16.msra.mxu0 0
    %249 = vmatprep.subr.bf16.mxu0 0
    %250 = vmatpush1.bf16.msra.mxu0 0
    %251 = vmatprep.subr.bf16.mxu0 0
    %252 = vmatpush1.bf16.msra.mxu0 0
    %253 = vmatprep.subr.bf16.mxu0 0
    %254 = vmatpush1.bf16.msra.mxu0 0
    %255 = vmatprep.subr.bf16.mxu0 0
    %256 = vmatpush1.bf16.msra.mxu0 0
    %257 = vmatprep.subr.bf16.mxu0 0
    %258 = vmatpush1.bf16.msra.mxu0 0
    %259 = vmatprep.subr.bf16.mxu0 0
    %260 = vmatpush1.bf16.msra.mxu0 0
    %261 = vmatprep.subr.bf16.mxu0 0
    %262 = vmatpush1.bf16.msra.mxu0 0
    %263 = vmatprep.subr.bf16.mxu0 0
    %264 = vmatpush1.bf16.msra.mxu0 0
    %265 = vmatprep.subr.bf16.mxu0 0
    %266 = vmatpush1.bf16.msra.mxu0 0
    %267 = vmatprep.subr.bf16.mxu0 0
    %268 = vmatpush1.bf16.msra.mxu0 0
    %269 = vmatprep.mubr.bf16.mxu0 0
    %270 = vmatmul.mubr.bf16.gmra.mrb[0].mxu0 %v235
    %v271 = vpop.f32.mrb[0].mxu0
    %v272 = vadd.f32 %v186, %v271
    %v273 = vpop.f32.mrb[0].mxu0
    %v274 = vadd.f32 %v190, %v273
    %v275 = vpop.f32.mrb[0].mxu0
    %v276 = vpop.f32.mrb[0].mxu0
    %277 = vdwg.mxu0
    %v278 = vmul.f32 %v272, 0.5
    %v279 = vmul.f32 %v274, 0.5
    %v280 = vmul.f32 %v272, 0.70710677
    %v281 = vmul.f32 %v274, 0.70710677
    %v282 = verf.f32.pop %v280
    %v283 = verf.f32.pop %v281
    %v284 = vadd.f32 %v282, 1.0
    %v285 = vadd.f32 %v283, 1.0
    %v286 = vmul.f32 %v278, %v284
    %v287 = vmul.f32 %v279, %v285
    %v288 = vld [vmem:[#allocation2] sm:$0xff]
    %v289 = vld [vmem:[#allocation2 + $0x14] sm:$0xff]
    %v290 = vld [vmem:[#allocation2 + $0x28] sm:$0xff]
    %v291 = vld [vmem:[#allocation2 + $0x3c] sm:$0xff]
    %v292 = vld [vmem:[#allocation2 + $0x50] sm:$0xff]
    %v293 = vld [vmem:[#allocation2 + $0x64] sm:$0xff]
    %v294 = vld [vmem:[#allocation2 + $0x78] sm:$0xff]
    %v295 = vld [vmem:[#allocation2 + $0x8c] sm:$0xff]
    %v296 = vld [vmem:[#allocation2 + $0xa0] sm:$0xff]
    %v297 = vld [vmem:[#allocation2 + $0xb4] sm:$0xff]
    %v298 = vld [vmem:[#allocation2 + $0xc8] sm:$0xff]
    %v299 = vld [vmem:[#allocation2 + $0xdc] sm:$0xff]
    %v300 = vld [vmem:[#allocation2 + $0xf0] sm:$0xff]
    %v301 = vld [vmem:[#allocation2 + $0x104] sm:$0xff]
    %v302 = vld [vmem:[#allocation2 + $0x118] sm:$0xff]
    %v303 = vld [vmem:[#allocation2 + $0x12c] sm:$0xff]
    %v304 = vld [vmem:[#allocation2 + $0x140] sm:$0xff]
    %v305 = vld [vmem:[#allocation2 + $0x154] sm:$0xff]
    %v306 = vld [vmem:[#allocation2 + $0x168] sm:$0xff]
    %v307 = vld [vmem:[#allocation2 + $0x17c] sm:$0xff]
    %v308 = vld [vmem:[#allocation2 + $0x190] sm:$0xff]
    %v309 = vld [vmem:[#allocation2 + $0x1a4] sm:$0xff]
    %v310 = vld [vmem:[#allocation2 + $0x1b8] sm:$0xff]
    %v311 = vld [vmem:[#allocation2 + $0x1cc] sm:$0xff]
    %v312 = vld [vmem:[#allocation2 + $0x1e0] sm:$0xff]
    %v313 = vld [vmem:[#allocation2 + $0x1f4] sm:$0xff]
    %v314 = vld [vmem:[#allocation2 + $0x208] sm:$0xff]
    %v315 = vld [vmem:[#allocation2 + $0x21c] sm:$0xff]
    %v316 = vld [vmem:[#allocation2 + $0x230] sm:$0xff]
    %v317 = vld [vmem:[#allocation2 + $0x244] sm:$0xff]
    %v318 = vld [vmem:[#allocation2 + $0x258] sm:$0xff]
    %v319 = vld [vmem:[#allocation2 + $0x26c] sm:$0xff]
    %v320 = vld [vmem:[%s4 + $0x2] sm:$0x3]
    %v321 = vpack.c.bf16 %v286, %v286
    %v322 = vpack.c.bf16 %v287, %v287
    %v324 = vlaneseq
    %v325 = vshrl.u32 %v324, 7
    %v326 = vsub.s32 0, %v325
    %v327 = vrot.slane %v320, %v326
    %v328 = vlaneseq
    %v329 = vshrl.u32 %v328, 7
    %v330 = vsub.s32 1, %v329
    %v331 = vrot.slane %v320, %v330
    %v366 = vunpack.c.l.b16 %v288
    %v367 = vunpack.c.h.b16 %v288
    %v368 = vunpack.c.l.b16 %v289
    %v369 = vunpack.c.h.b16 %v289
    %v370 = vunpack.c.l.b16 %v290
    %v371 = vunpack.c.h.b16 %v290
    %v372 = vunpack.c.l.b16 %v291
    %v373 = vunpack.c.h.b16 %v291
    %v374 = vunpack.c.l.b16 %v292
    %v375 = vunpack.c.h.b16 %v292
    %v376 = vunpack.c.l.b16 %v293
    %v377 = vunpack.c.h.b16 %v293
    %v378 = vunpack.c.l.b16 %v294
    %v379 = vunpack.c.h.b16 %v294
    %v380 = vunpack.c.l.b16 %v295
    %v381 = vunpack.c.h.b16 %v295
    %v382 = vunpack.c.l.b16 %v296
    %v383 = vunpack.c.h.b16 %v296
    %v384 = vunpack.c.l.b16 %v297
    %v385 = vunpack.c.h.b16 %v297
    %v386 = vunpack.c.l.b16 %v298
    %v387 = vunpack.c.h.b16 %v298
    %v388 = vunpack.c.l.b16 %v299
    %v389 = vunpack.c.h.b16 %v299
    %v390 = vunpack.c.l.b16 %v300
    %v391 = vunpack.c.h.b16 %v300
    %v392 = vunpack.c.l.b16 %v301
    %v393 = vunpack.c.h.b16 %v301
    %v394 = vunpack.c.l.b16 %v302
    %v395 = vunpack.c.h.b16 %v302
    %v396 = vunpack.c.l.b16 %v303
    %v397 = vunpack.c.h.b16 %v303
    %v398 = vunpack.c.l.b16 %v304
    %v399 = vunpack.c.h.b16 %v304
    %v400 = vunpack.c.l.b16 %v305
    %v401 = vunpack.c.h.b16 %v305
    %v402 = vunpack.c.l.b16 %v306
    %v403 = vunpack.c.h.b16 %v306
    %v404 = vunpack.c.l.b16 %v307
    %v405 = vunpack.c.h.b16 %v307
    %v406 = vunpack.c.l.b16 %v308
    %v407 = vunpack.c.h.b16 %v308
    %v408 = vunpack.c.l.b16 %v309
    %v409 = vunpack.c.h.b16 %v309
    %v410 = vunpack.c.l.b16 %v310
    %v411 = vunpack.c.h.b16 %v310
    %v412 = vunpack.c.l.b16 %v311
    %v413 = vunpack.c.h.b16 %v311
    %v414 = vunpack.c.l.b16 %v312
    %v415 = vunpack.c.h.b16 %v312
    %v416 = vunpack.c.l.b16 %v313
    %v417 = vunpack.c.h.b16 %v313
    %v418 = vunpack.c.l.b16 %v314
    %v419 = vunpack.c.h.b16 %v314
    %v420 = vunpack.c.l.b16 %v315
    %v421 = vunpack.c.h.b16 %v315
    %v422 = vunpack.c.l.b16 %v316
    %v423 = vunpack.c.h.b16 %v316
    %v424 = vunpack.c.l.b16 %v317
    %v425 = vunpack.c.h.b16 %v317
    %v426 = vunpack.c.l.b16 %v318
    %v427 = vunpack.c.h.b16 %v318
    %v428 = vunpack.c.l.b16 %v319
    %v429 = vunpack.c.h.b16 %v319
    %v430 = vpack.c.b16 %v368, %v366
    %v431 = vpack.c.b16 %v369, %v367
    %v432 = vpack.c.b16 %v372, %v370
    %v433 = vpack.c.b16 %v373, %v371
    %v434 = vpack.c.b16 %v376, %v374
    %v435 = vpack.c.b16 %v377, %v375
    %v436 = vpack.c.b16 %v380, %v378
    %v437 = vpack.c.b16 %v381, %v379
    %v438 = vpack.c.b16 %v384, %v382
    %v439 = vpack.c.b16 %v385, %v383
    %v440 = vpack.c.b16 %v388, %v386
    %v441 = vpack.c.b16 %v389, %v387
    %v442 = vpack.c.b16 %v392, %v390
    %v443 = vpack.c.b16 %v393, %v391
    %v444 = vpack.c.b16 %v396, %v394
    %v445 = vpack.c.b16 %v397, %v395
    %v446 = vpack.c.b16 %v400, %v398
    %v447 = vpack.c.b16 %v401, %v399
    %v448 = vpack.c.b16 %v404, %v402
    %v449 = vpack.c.b16 %v405, %v403
    %v450 = vpack.c.b16 %v408, %v406
    %v451 = vpack.c.b16 %v409, %v407
    %v452 = vpack.c.b16 %v412, %v410
    %v453 = vpack.c.b16 %v413, %v411
    %v454 = vpack.c.b16 %v416, %v414
    %v455 = vpack.c.b16 %v417, %v415
    %v456 = vpack.c.b16 %v420, %v418
    %v457 = vpack.c.b16 %v421, %v419
    %v458 = vpack.c.b16 %v424, %v422
    %v459 = vpack.c.b16 %v425, %v423
    %v460 = vpack.c.b16 %v428, %v426
    %v461 = vpack.c.b16 %v429, %v427
    %494 = vmatprep.subr.bf16.mxu0 %v431
    %495 = vmatpush1.bf16.msra.mxu0 %v430
    %496 = vmatprep.subr.bf16.mxu0 %v433
    %497 = vmatpush1.bf16.msra.mxu0 %v432
    %498 = vmatprep.subr.bf16.mxu0 %v435
    %499 = vmatpush1.bf16.msra.mxu0 %v434
    %500 = vmatprep.subr.bf16.mxu0 %v437
    %501 = vmatpush1.bf16.msra.mxu0 %v436
    %502 = vmatprep.subr.bf16.mxu0 %v439
    %503 = vmatpush1.bf16.msra.mxu0 %v438
    %504 = vmatprep.subr.bf16.mxu0 %v441
    %505 = vmatpush1.bf16.msra.mxu0 %v440
    %506 = vmatprep.subr.bf16.mxu0 %v443
    %507 = vmatpush1.bf16.msra.mxu0 %v442
    %508 = vmatprep.subr.bf16.mxu0 %v445
    %509 = vmatpush1.bf16.msra.mxu0 %v444
    %510 = vmatprep.subr.bf16.mxu0 %v447
    %511 = vmatpush1.bf16.msra.mxu0 %v446
    %512 = vmatprep.subr.bf16.mxu0 %v449
    %513 = vmatpush1.bf16.msra.mxu0 %v448
    %514 = vmatprep.subr.bf16.mxu0 %v451
    %515 = vmatpush1.bf16.msra.mxu0 %v450
    %516 = vmatprep.subr.bf16.mxu0 %v453
    %517 = vmatpush1.bf16.msra.mxu0 %v452
    %518 = vmatprep.subr.bf16.mxu0 %v455
    %519 = vmatpush1.bf16.msra.mxu0 %v454
    %520 = vmatprep.subr.bf16.mxu0 %v457
    %521 = vmatpush1.bf16.msra.mxu0 %v456
    %522 = vmatprep.subr.bf16.mxu0 %v459
    %523 = vmatpush1.bf16.msra.mxu0 %v458
    %524 = vmatprep.subr.bf16.mxu0 %v461
    %525 = vmatpush1.bf16.msra.mxu0 %v460
    %526 = vmatprep.mubr.bf16.mxu0 %v322
    %527 = vmatmul.mubr.bf16.gmra.mrb[0].mxu0 %v321
    %v528 = vpop.f32.mrb[0].mxu0
    %v529 = vadd.f32 %v327, %v528
    %v530 = vpop.f32.mrb[0].mxu0
    %v531 = vadd.f32 %v331, %v530
    %v532 = vpop.f32.mrb[0].mxu0
    %v533 = vpop.f32.mrb[0].mxu0
    %534 = vdwg.mxu0
    %v535 = vxor.u32 %v529, 2147483648
    %v536 = vxor.u32 %v531, 2147483648
    %v537 = vmul.f32 %v535, 1.442695
    %v538 = vpow.pop %v537
    %v539 = vmul.f32 %v536, 1.442695
    %v540 = vpow.pop %v539
    %v541 = vadd.f32 %v538, 1.0
    %v542 = vadd.f32 %v540, 1.0
    %v543 = vrcp.pop %v541
    %v544 = vmul.f32 1.0, %v543
    %v545 = vrcp.pop %v542
    %v546 = vmul.f32 1.0, %v545
    %v547 = vmul.f32 %v529, %v544
    %v548 = vmul.f32 %v531, %v546
    %v549 = vld [vmem:[#allocation2 + $0x8] sm:$0xff]
    %v550 = vld [vmem:[#allocation2 + $0x10] sm:$0xf]
    %v551 = vld [vmem:[#allocation2 + $0x1c] sm:$0xff]
    %v552 = vld [vmem:[#allocation2 + $0x24] sm:$0xf]
    %v553 = vld [vmem:[#allocation2 + $0x30] sm:$0xff]
    %v554 = vld [vmem:[#allocation2 + $0x38] sm:$0xf]
    %v555 = vld [vmem:[#allocation2 + $0x44] sm:$0xff]
    %v556 = vld [vmem:[#allocation2 + $0x4c] sm:$0xf]
    %v557 = vld [vmem:[#allocation2 + $0x58] sm:$0xff]
    %v558 = vld [vmem:[#allocation2 + $0x60] sm:$0xf]
    %v559 = vld [vmem:[#allocation2 + $0x6c] sm:$0xff]
    %v560 = vld [vmem:[#allocation2 + $0x74] sm:$0xf]
    %v561 = vld [vmem:[#allocation2 + $0x80] sm:$0xff]
    %v562 = vld [vmem:[#allocation2 + $0x88] sm:$0xf]
    %v563 = vld [vmem:[#allocation2 + $0x94] sm:$0xff]
    %v564 = vld [vmem:[#allocation2 + $0x9c] sm:$0xf]
    %v565 = vld [vmem:[#allocation2 + $0xa8] sm:$0xff]
    %v566 = vld [vmem:[#allocation2 + $0xb0] sm:$0xf]
    %v567 = vld [vmem:[#allocation2 + $0xbc] sm:$0xff]
    %v568 = vld [vmem:[#allocation2 + $0xc4] sm:$0xf]
    %v569 = vld [vmem:[#allocation2 + $0xd0] sm:$0xff]
    %v570 = vld [vmem:[#allocation2 + $0xd8] sm:$0xf]
    %v571 = vld [vmem:[#allocation2 + $0xe4] sm:$0xff]
    %v572 = vld [vmem:[#allocation2 + $0xec] sm:$0xf]
    %v573 = vld [vmem:[#allocation2 + $0xf8] sm:$0xff]
    %v574 = vld [vmem:[#allocation2 + $0x100] sm:$0xf]
    %v575 = vld [vmem:[#allocation2 + $0x10c] sm:$0xff]
    %v576 = vld [vmem:[#allocation2 + $0x114] sm:$0xf]
    %v577 = vld [vmem:[#allocation2 + $0x120] sm:$0xff]
    %v578 = vld [vmem:[#allocation2 + $0x128] sm:$0xf]
    %v579 = vld [vmem:[#allocation2 + $0x134] sm:$0xff]
    %v580 = vld [vmem:[#allocation2 + $0x13c] sm:$0xf]
    %v581 = vld [vmem:[#allocation2 + $0x148] sm:$0xff]
    %v582 = vld [vmem:[#allocation2 + $0x150] sm:$0xf]
    %v583 = vld [vmem:[#allocation2 + $0x15c] sm:$0xff]
    %v584 = vld [vmem:[#allocation2 + $0x164] sm:$0xf]
    %v585 = vld [vmem:[#allocation2 + $0x170] sm:$0xff]
    %v586 = vld [vmem:[#allocation2 + $0x178] sm:$0xf]
    %v587 = vld [vmem:[#allocation2 + $0x184] sm:$0xff]
    %v588 = vld [vmem:[#allocation2 + $0x18c] sm:$0xf]
    %v589 = vld [vmem:[#allocation2 + $0x198] sm:$0xff]
    %v590 = vld [vmem:[#allocation2 + $0x1a0] sm:$0xf]
    %v591 = vld [vmem:[#allocation2 + $0x1ac] sm:$0xff]
    %v592 = vld [vmem:[#allocation2 + $0x1b4] sm:$0xf]
    %v593 = vld [vmem:[#allocation2 + $0x1c0] sm:$0xff]
    %v594 = vld [vmem:[#allocation2 + $0x1c8] sm:$0xf]
    %v595 = vld [vmem:[#allocation2 + $0x1d4] sm:$0xff]
    %v596 = vld [vmem:[#allocation2 + $0x1dc] sm:$0xf]
    %v597 = vld [vmem:[#allocation2 + $0x1e8] sm:$0xff]
    %v598 = vld [vmem:[#allocation2 + $0x1f0] sm:$0xf]
    %v599 = vld [vmem:[#allocation2 + $0x1fc] sm:$0xff]
    %v600 = vld [vmem:[#allocation2 + $0x204] sm:$0xf]
    %v601 = vld [vmem:[#allocation2 + $0x210] sm:$0xff]
    %v602 = vld [vmem:[#allocation2 + $0x218] sm:$0xf]
    %v603 = vld [vmem:[#allocation2 + $0x224] sm:$0xff]
    %v604 = vld [vmem:[#allocation2 + $0x22c] sm:$0xf]
    %v605 = vld [vmem:[#allocation2 + $0x238] sm:$0xff]
    %v606 = vld [vmem:[#allocation2 + $0x240] sm:$0xf]
    %v607 = vld [vmem:[#allocation2 + $0x24c] sm:$0xff]
    %v608 = vld [vmem:[#allocation2 + $0x254] sm:$0xf]
    %v609 = vld [vmem:[#allocation2 + $0x260] sm:$0xff]
    %v610 = vld [vmem:[#allocation2 + $0x268] sm:$0xf]
    %v611 = vld [vmem:[#allocation2 + $0x274] sm:$0xff]
    %v612 = vld [vmem:[#allocation2 + $0x27c] sm:$0xf]
    %v613 = vld [vmem:[%s4 + $0x6] sm:$0x7]
    %v614 = vpack.c.bf16 %v547, %v547
    %v615 = vpack.c.bf16 %v548, %v548
    %v617 = vlaneseq
    %v618 = vshrl.u32 %v617, 7
    %v619 = vsub.s32 0, %v618
    %v620 = vrot.slane %v613, %v619
    %v621 = vlaneseq
    %v622 = vshrl.u32 %v621, 7
    %v623 = vsub.s32 1, %v622
    %v624 = vrot.slane %v613, %v623
    %v625 = vlaneseq
    %v626 = vshrl.u32 %v625, 7
    %v627 = vsub.s32 2, %v626
    %v628 = vrot.slane %v613, %v627
    %v696 = vunpack.c.l.b16 %v549
    %v697 = vunpack.c.h.b16 %v549
    %v698 = vunpack.c.l.b16 %v550
    %v699 = vunpack.c.l.b16 %v551
    %v700 = vunpack.c.h.b16 %v551
    %v701 = vunpack.c.l.b16 %v552
    %v702 = vunpack.c.l.b16 %v553
    %v703 = vunpack.c.h.b16 %v553
    %v704 = vunpack.c.l.b16 %v554
    %v705 = vunpack.c.l.b16 %v555
    %v706 = vunpack.c.h.b16 %v555
    %v707 = vunpack.c.l.b16 %v556
    %v708 = vunpack.c.l.b16 %v557
    %v709 = vunpack.c.h.b16 %v557
    %v710 = vunpack.c.l.b16 %v558
    %v711 = vunpack.c.l.b16 %v559
    %v712 = vunpack.c.h.b16 %v559
    %v713 = vunpack.c.l.b16 %v560
    %v714 = vunpack.c.l.b16 %v561
    %v715 = vunpack.c.h.b16 %v561
    %v716 = vunpack.c.l.b16 %v562
    %v717 = vunpack.c.l.b16 %v563
    %v718 = vunpack.c.h.b16 %v563
    %v719 = vunpack.c.l.b16 %v564
    %v720 = vunpack.c.l.b16 %v565
    %v721 = vunpack.c.h.b16 %v565
    %v722 = vunpack.c.l.b16 %v566
    %v723 = vunpack.c.l.b16 %v567
    %v724 = vunpack.c.h.b16 %v567
    %v725 = vunpack.c.l.b16 %v568
    %v726 = vunpack.c.l.b16 %v569
    %v727 = vunpack.c.h.b16 %v569
    %v728 = vunpack.c.l.b16 %v570
    %v729 = vunpack.c.l.b16 %v571
    %v730 = vunpack.c.h.b16 %v571
    %v731 = vunpack.c.l.b16 %v572
    %v732 = vunpack.c.l.b16 %v573
    %v733 = vunpack.c.h.b16 %v573
    %v734 = vunpack.c.l.b16 %v574
    %v735 = vunpack.c.l.b16 %v575
    %v736 = vunpack.c.h.b16 %v575
    %v737 = vunpack.c.l.b16 %v576
    %v738 = vunpack.c.l.b16 %v577
    %v739 = vunpack.c.h.b16 %v577
    %v740 = vunpack.c.l.b16 %v578
    %v741 = vunpack.c.l.b16 %v579
    %v742 = vunpack.c.h.b16 %v579
    %v743 = vunpack.c.l.b16 %v580
    %v744 = vunpack.c.l.b16 %v581
    %v745 = vunpack.c.h.b16 %v581
    %v746 = vunpack.c.l.b16 %v582
    %v747 = vunpack.c.l.b16 %v583
    %v748 = vunpack.c.h.b16 %v583
    %v749 = vunpack.c.l.b16 %v584
    %v750 = vunpack.c.l.b16 %v585
    %v751 = vunpack.c.h.b16 %v585
    %v752 = vunpack.c.l.b16 %v586
    %v753 = vunpack.c.l.b16 %v587
    %v754 = vunpack.c.h.b16 %v587
    %v755 = vunpack.c.l.b16 %v588
    %v756 = vunpack.c.l.b16 %v589
    %v757 = vunpack.c.h.b16 %v589
    %v758 = vunpack.c.l.b16 %v590
    %v759 = vunpack.c.l.b16 %v591
    %v760 = vunpack.c.h.b16 %v591
    %v761 = vunpack.c.l.b16 %v592
    %v762 = vunpack.c.l.b16 %v593
    %v763 = vunpack.c.h.b16 %v593
    %v764 = vunpack.c.l.b16 %v594
    %v765 = vunpack.c.l.b16 %v595
    %v766 = vunpack.c.h.b16 %v595
    %v767 = vunpack.c.l.b16 %v596
    %v768 = vunpack.c.l.b16 %v597
    %v769 = vunpack.c.h.b16 %v597
    %v770 = vunpack.c.l.b16 %v598
    %v771 = vunpack.c.l.b16 %v599
    %v772 = vunpack.c.h.b16 %v599
    %v773 = vunpack.c.l.b16 %v600
    %v774 = vunpack.c.l.b16 %v601
    %v775 = vunpack.c.h.b16 %v601
    %v776 = vunpack.c.l.b16 %v602
    %v777 = vunpack.c.l.b16 %v603
    %v778 = vunpack.c.h.b16 %v603
    %v779 = vunpack.c.l.b16 %v604
    %v780 = vunpack.c.l.b16 %v605
    %v781 = vunpack.c.h.b16 %v605
    %v782 = vunpack.c.l.b16 %v606
    %v783 = vunpack.c.l.b16 %v607
    %v784 = vunpack.c.h.b16 %v607
    %v785 = vunpack.c.l.b16 %v608
    %v786 = vunpack.c.l.b16 %v609
    %v787 = vunpack.c.h.b16 %v609
    %v788 = vunpack.c.l.b16 %v610
    %v789 = vunpack.c.l.b16 %v611
    %v790 = vunpack.c.h.b16 %v611
    %v791 = vunpack.c.l.b16 %v612
    %v792 = vpack.c.b16 %v699, %v696
    %v793 = vpack.c.b16 %v700, %v697
    %v794 = vpack.c.b16 %v701, %v698
    %v795 = vpack.c.b16 %v705, %v702
    %v796 = vpack.c.b16 %v706, %v703
    %v797 = vpack.c.b16 %v707, %v704
    %v798 = vpack.c.b16 %v711, %v708
    %v799 = vpack.c.b16 %v712, %v709
    %v800 = vpack.c.b16 %v713, %v710
    %v801 = vpack.c.b16 %v717, %v714
    %v802 = vpack.c.b16 %v718, %v715
    %v803 = vpack.c.b16 %v719, %v716
    %v804 = vpack.c.b16 %v723, %v720
    %v805 = vpack.c.b16 %v724, %v721
    %v806 = vpack.c.b16 %v725, %v722
    %v807 = vpack.c.b16 %v729, %v726
    %v808 = vpack.c.b16 %v730, %v727
    %v809 = vpack.c.b16 %v731, %v728
    %v810 = vpack.c.b16 %v735, %v732
    %v811 = vpack.c.b16 %v736, %v733
    %v812 = vpack.c.b16 %v737, %v734
    %v813 = vpack.c.b16 %v741, %v738
    %v814 = vpack.c.b16 %v742, %v739
    %v815 = vpack.c.b16 %v743, %v740
    %v816 = vpack.c.b16 %v747, %v744
    %v817 = vpack.c.b16 %v748, %v745
    %v818 = vpack.c.b16 %v749, %v746
    %v819 = vpack.c.b16 %v753, %v750
    %v820 = vpack.c.b16 %v754, %v751
    %v821 = vpack.c.b16 %v755, %v752
    %v822 = vpack.c.b16 %v759, %v756
    %v823 = vpack.c.b16 %v760, %v757
    %v824 = vpack.c.b16 %v761, %v758
    %v825 = vpack.c.b16 %v765, %v762
    %v826 = vpack.c.b16 %v766, %v763
    %v827 = vpack.c.b16 %v767, %v764
    %v828 = vpack.c.b16 %v771, %v768
    %v829 = vpack.c.b16 %v772, %v769
    %v830 = vpack.c.b16 %v773, %v770
    %v831 = vpack.c.b16 %v777, %v774
    %v832 = vpack.c.b16 %v778, %v775
    %v833 = vpack.c.b16 %v779, %v776
    %v834 = vpack.c.b16 %v783, %v780
    %v835 = vpack.c.b16 %v784, %v781
    %v836 = vpack.c.b16 %v785, %v782
    %v837 = vpack.c.b16 %v789, %v786
    %v838 = vpack.c.b16 %v790, %v787
    %v839 = vpack.c.b16 %v791, %v788
    %888 = vmatprep.subr.bf16.mxu0 %v793
    %889 = vmatpush1.bf16.msra.mxu0 %v792
    %890 = vmatprep.subr.bf16.mxu0 %v796
    %891 = vmatpush1.bf16.msra.mxu0 %v795
    %892 = vmatprep.subr.bf16.mxu0 %v799
    %893 = vmatpush1.bf16.msra.mxu0 %v798
    %894 = vmatprep.subr.bf16.mxu0 %v802
    %895 = vmatpush1.bf16.msra.mxu0 %v801
    %896 = vmatprep.subr.bf16.mxu0 %v805
    %897 = vmatpush1.bf16.msra.mxu0 %v804
    %898 = vmatprep.subr.bf16.mxu0 %v808
    %899 = vmatpush1.bf16.msra.mxu0 %v807
    %900 = vmatprep.subr.bf16.mxu0 %v811
    %901 = vmatpush1.bf16.msra.mxu0 %v810
    %902 = vmatprep.subr.bf16.mxu0 %v814
    %903 = vmatpush1.bf16.msra.mxu0 %v813
    %904 = vmatprep.subr.bf16.mxu0 %v817
    %905 = vmatpush1.bf16.msra.mxu0 %v816
    %906 = vmatprep.subr.bf16.mxu0 %v820
    %907 = vmatpush1.bf16.msra.mxu0 %v819
    %908 = vmatprep.subr.bf16.mxu0 %v823
    %909 = vmatpush1.bf16.msra.mxu0 %v822
    %910 = vmatprep.subr.bf16.mxu0 %v826
    %911 = vmatpush1.bf16.msra.mxu0 %v825
    %912 = vmatprep.subr.bf16.mxu0 %v829
    %913 = vmatpush1.bf16.msra.mxu0 %v828
    %914 = vmatprep.subr.bf16.mxu0 %v832
    %915 = vmatpush1.bf16.msra.mxu0 %v831
    %916 = vmatprep.subr.bf16.mxu0 %v835
    %917 = vmatpush1.bf16.msra.mxu0 %v834
    %918 = vmatprep.subr.bf16.mxu0 %v838
    %919 = vmatpush1.bf16.msra.mxu0 %v837
    %920 = vmatprep.mubr.bf16.mxu0 %v615
    %921 = vmatmul.mubr.bf16.gmra.mrb[0].mxu0 %v614
    %v922 = vpop.f32.mrb[0].mxu0
    %v923 = vadd.f32 %v620, %v922
    %v924 = vpop.f32.mrb[0].mxu0
    %v925 = vadd.f32 %v624, %v924
    %v926 = vpop.f32.mrb[0].mxu0
    %v927 = vpop.f32.mrb[0].mxu0
    %928 = vdwg.mxu0
    %929 = vmatprep.subr.bf16.mxu0 0
    %930 = vmatpush1.bf16.msra.mxu0 %v794
    %931 = vmatprep.subr.bf16.mxu0 0
    %932 = vmatpush1.bf16.msra.mxu0 %v797
    %933 = vmatprep.subr.bf16.mxu0 0
    %934 = vmatpush1.bf16.msra.mxu0 %v800
    %935 = vmatprep.subr.bf16.mxu0 0
    %936 = vmatpush1.bf16.msra.mxu0 %v803
    %937 = vmatprep.subr.bf16.mxu0 0
    %938 = vmatpush1.bf16.msra.mxu0 %v806
    %939 = vmatprep.subr.bf16.mxu0 0
    %940 = vmatpush1.bf16.msra.mxu0 %v809
    %941 = vmatprep.subr.bf16.mxu0 0
    %942 = vmatpush1.bf16.msra.mxu0 %v812
    %943 = vmatprep.subr.bf16.mxu0 0
    %944 = vmatpush1.bf16.msra.mxu0 %v815
    %945 = vmatprep.subr.bf16.mxu0 0
    %946 = vmatpush1.bf16.msra.mxu0 %v818
    %947 = vmatprep.subr.bf16.mxu0 0
    %948 = vmatpush1.bf16.msra.mxu0 %v821
    %949 = vmatprep.subr.bf16.mxu0 0
    %950 = vmatpush1.bf16.msra.mxu0 %v824
    %951 = vmatprep.subr.bf16.mxu0 0
    %952 = vmatpush1.bf16.msra.mxu0 %v827
    %953 = vmatprep.subr.bf16.mxu0 0
    %954 = vmatpush1.bf16.msra.mxu0 %v830
    %955 = vmatprep.subr.bf16.mxu0 0
    %956 = vmatpush1.bf16.msra.mxu0 %v833
    %957 = vmatprep.subr.bf16.mxu0 0
    %958 = vmatpush1.bf16.msra.mxu0 %v836
    %959 = vmatprep.subr.bf16.mxu0 0
    %960 = vmatpush1.bf16.msra.mxu0 %v839
    %961 = vmatprep.mubr.bf16.mxu0 %v615
    %962 = vmatmul.mubr.bf16.gmra.mrb[0].mxu0 %v614
    %v963 = vpop.f32.mrb[0].mxu0
    %v964 = vadd.f32 %v628, %v963
    %v965 = vpop.f32.mrb[0].mxu0
    %v966 = vpop.f32.mrb[0].mxu0
    %v967 = vpop.f32.mrb[0].mxu0
    %968 = vdwg.mxu0
    %v969 = vld [vmem:[%s4 + $0x15] sm:$0x1]
    %971 = vset.pattern.permute.xlu0 0
    %972 = vperm.xlu0 %971, %v49
    %v973 = vpop.permute.xlu0 %972
    %v976 = vlaneseq
    %v977 = vshrl.u32 %v976, 7
    %v978 = vsub.s32 0, %v977
    %v979 = vrot.slane %v969, %v978
    %v981 = vmul.f32 %v973, %v979
    %v982 = vld [vmem:[%s4 + $0x16] sm:$0x1]
    %983 = vset.pattern.permute.xlu0 1
    %984 = vperm.xlu0 %983, %v49
    %v985 = vpop.permute.xlu0 %984
    %v988 = vlaneseq
    %v989 = vshrl.u32 %v988, 7
    %v990 = vsub.s32 0, %v989
    %v991 = vrot.slane %v982, %v990
    %v993 = vmul.f32 %v985, %v991
    %v994 = vadd.f32 %v981, %v993
    %v995 = vld [vmem:[%s4 + $0x4] sm:$0x1]
    %v997 = vlaneseq
    %v998 = vshrl.u32 %v997, 7
    %v999 = vsub.s32 0, %v998
    %v1000 = vrot.slane %v995, %v999
    %v1002 = vadd.f32 %v994, %v1000
    %v1003 = vtanh.pop %v1002
    %v1004 = vld [vmem:[#allocation4 + $0x8] sm:$0xf]
    %v1005 = vld [vmem:[#allocation4 + $0x2c] sm:$0xf]
    %v1006 = vld [vmem:[#allocation4 + $0x50] sm:$0xf]
    %v1007 = vld [vmem:[#allocation4 + $0x74] sm:$0xf]
    %v1008 = vld [vmem:[#allocation4 + $0x98] sm:$0xf]
    %v1009 = vld [vmem:[#allocation4 + $0xbc] sm:$0xf]
    %v1010 = vld [vmem:[#allocation4 + $0xe0] sm:$0xf]
    %v1011 = vld [vmem:[#allocation4 + $0x104] sm:$0xf]
    %v1012 = vld [vmem:[%s4 + $0x5] sm:$0x1]
    %v1013 = vpack.c.bf16 %v1003, %v1003
    %v1015 = vlaneseq
    %v1016 = vshrl.u32 %v1015, 7
    %v1017 = vsub.s32 0, %v1016
    %v1018 = vrot.slane %v1012, %v1017
    %v1028 = vunpack.c.l.b16 %v1004
    %v1029 = vunpack.c.l.b16 %v1005
    %v1030 = vunpack.c.l.b16 %v1006
    %v1031 = vunpack.c.l.b16 %v1007
    %v1032 = vunpack.c.l.b16 %v1008
    %v1033 = vunpack.c.l.b16 %v1009
    %v1034 = vunpack.c.l.b16 %v1010
    %v1035 = vunpack.c.l.b16 %v1011
    %v1036 = vpack.c.b16 %v1029, %v1028
    %v1037 = vpack.c.b16 %v1031, %v1030
    %v1038 = vpack.c.b16 %v1033, %v1032
    %v1039 = vpack.c.b16 %v1035, %v1034
    %v1045 = vsel %vm233, %v1013, 0
    %1047 = vmatprep.subr.bf16.mxu0 0
    %1048 = vmatpush1.bf16.msra.mxu0 %v1036
    %1049 = vmatprep.subr.bf16.mxu0 0
    %1050 = vmatpush1.bf16.msra.mxu0 %v1037
    %1051 = vmatprep.subr.bf16.mxu0 0
    %1052 = vmatpush1.bf16.msra.mxu0 %v1038
    %1053 = vmatprep.subr.bf16.mxu0 0
    %1054 = vmatpush1.bf16.msra.mxu0 %v1039
    %1055 = vmatprep.subr.bf16.mxu0 0
    %1056 = vmatpush1.bf16.msra.mxu0 0
    %1057 = vmatprep.subr.bf16.mxu0 0
    %1058 = vmatpush1.bf16.msra.mxu0 0
    %1059 = vmatprep.subr.bf16.mxu0 0
    %1060 = vmatpush1.bf16.msra.mxu0 0
    %1061 = vmatprep.subr.bf16.mxu0 0
    %1062 = vmatpush1.bf16.msra.mxu0 0
    %1063 = vmatprep.subr.bf16.mxu0 0
    %1064 = vmatpush1.bf16.msra.mxu0 0
    %1065 = vmatprep.subr.bf16.mxu0 0
    %1066 = vmatpush1.bf16.msra.mxu0 0
    %1067 = vmatprep.subr.bf16.mxu0 0
    %1068 = vmatpush1.bf16.msra.mxu0 0
    %1069 = vmatprep.subr.bf16.mxu0 0
    %1070 = vmatpush1.bf16.msra.mxu0 0
    %1071 = vmatprep.subr.bf16.mxu0 0
    %1072 = vmatpush1.bf16.msra.mxu0 0
    %1073 = vmatprep.subr.bf16.mxu0 0
    %1074 = vmatpush1.bf16.msra.mxu0 0
    %1075 = vmatprep.subr.bf16.mxu0 0
    %1076 = vmatpush1.bf16.msra.mxu0 0
    %1077 = vmatprep.subr.bf16.mxu0 0
    %1078 = vmatpush1.bf16.msra.mxu0 0
    %1079 = vmatprep.mubr.bf16.mxu0 0
    %1080 = vmatmul.mubr.bf16.gmra.mrb[0].mxu0 %v1045
    %v1081 = vpop.f32.mrb[0].mxu0
    %v1082 = vadd.f32 %v1018, %v1081
    %v1083 = vpop.f32.mrb[0].mxu0
    %v1084 = vpop.f32.mrb[0].mxu0
    %v1085 = vpop.f32.mrb[0].mxu0
    %1086 = vdwg.mxu0
    %v1087 = vld [vmem:[%s4 + $0x9] sm:$0x1]
    %v1088 = vld [vmem:[%s4 + $0xa] sm:$0x1]
    %v1089 = vsel %vm233, %v1082, 0.0
    %v1090 = vrot.slane %v1089, 4
    %v1091 = vadd.f32 %v1089, %v1090
    %v1092 = vrot.slane %v1091, 2
    %v1093 = vadd.f32 %v1091, %v1092
    %v1094 = vrot.slane %v1093, 1
    %v1095 = vadd.f32 %v1093, %v1094
    %v1096 = vrcp.pop 8.0
    %v1097 = vmul.f32 %v1095, %v1096
    %v1098 = vmul.f32 %v1082, %v1082
    %v1099 = vsel %vm233, %v1098, 0.0
    %v1100 = vrot.slane %v1099, 4
    %v1101 = vadd.f32 %v1099, %v1100
    %v1102 = vrot.slane %v1101, 2
    %v1103 = vadd.f32 %v1101, %v1102
    %v1104 = vrot.slane %v1103, 1
    %v1105 = vadd.f32 %v1103, %v1104
    %v1106 = vmul.f32 %v1105, %v1096
    %v1107 = vmul.f32 %v1097, %v1097
    %v1108 = vsub.f32 %v1106, %v1107
    %v1109 = vmax.f32 %v1108, 0.0
    %v1110 = vsub.f32 %v1082, %v1097
    %v1111 = vadd.f32 %v1109, 1e-05
    %v1112 = vrsqrt.pop %v1111
    %v1113 = vmul.f32 %v1110, %v1112
    %v1115 = vlaneseq
    %v1116 = vshrl.u32 %v1115, 7
    %v1117 = vsub.s32 0, %v1116
    %v1118 = vrot.slane %v1087, %v1117
    %v1120 = vmul.f32 %v1113, %v1118
    %v1122 = vlaneseq
    %v1123 = vshrl.u32 %v1122, 7
    %v1124 = vsub.s32 0, %v1123
    %v1125 = vrot.slane %v1088, %v1124
    %v1127 = vadd.f32 %v1120, %v1125
    %v1128 = vtanh.pop %v1127
    %v1129 = vadd.f32 %v1128, %v923
    %v1130 = vld [vmem:[#allocation4 + $0xc] sm:$0xf]
    %v1131 = vld [vmem:[#allocation4 + $0x30] sm:$0xf]
    %v1132 = vld [vmem:[#allocation4 + $0x54] sm:$0xf]
    %v1133 = vld [vmem:[#allocation4 + $0x78] sm:$0xf]
    %v1134 = vld [vmem:[#allocation4 + $0x9c] sm:$0xf]
    %v1135 = vld [vmem:[#allocation4 + $0xc0] sm:$0xf]
    %v1136 = vld [vmem:[#allocation4 + $0xe4] sm:$0xf]
    %v1137 = vld [vmem:[#allocation4 + $0x108] sm:$0xf]
    %v1138 = vld [vmem:[%s4 + $0xb] sm:$0x1]
    %v1139 = vpack.c.bf16 %v1129, %v1129
    %v1141 = vlaneseq
    %v1142 = vshrl.u32 %v1141, 7
    %v1143 = vsub.s32 0, %v1142
    %v1144 = vrot.slane %v1138, %v1143
    %v1154 = vunpack.c.l.b16 %v1130
    %v1155 = vunpack.c.l.b16 %v1131
    %v1156 = vunpack.c.l.b16 %v1132
    %v1157 = vunpack.c.l.b16 %v1133
    %v1158 = vunpack.c.l.b16 %v1134
    %v1159 = vunpack.c.l.b16 %v1135
    %v1160 = vunpack.c.l.b16 %v1136
    %v1161 = vunpack.c.l.b16 %v1137
    %v1162 = vpack.c.b16 %v1155, %v1154
    %v1163 = vpack.c.b16 %v1157, %v1156
    %v1164 = vpack.c.b16 %v1159, %v1158
    %v1165 = vpack.c.b16 %v1161, %v1160
    %v1171 = vsel %vm233, %v1139, 0
    %1173 = vmatprep.subr.bf16.mxu0 0
    %1174 = vmatpush1.bf16.msra.mxu0 %v1162
    %1175 = vmatprep.subr.bf16.mxu0 0
    %1176 = vmatpush1.bf16.msra.mxu0 %v1163
    %1177 = vmatprep.subr.bf16.mxu0 0
    %1178 = vmatpush1.bf16.msra.mxu0 %v1164
    %1179 = vmatprep.subr.bf16.mxu0 0
    %1180 = vmatpush1.bf16.msra.mxu0 %v1165
    %1181 = vmatprep.subr.bf16.mxu0 0
    %1182 = vmatpush1.bf16.msra.mxu0 0
    %1183 = vmatprep.subr.bf16.mxu0 0
    %1184 = vmatpush1.bf16.msra.mxu0 0
    %1185 = vmatprep.subr.bf16.mxu0 0
    %1186 = vmatpush1.bf16.msra.mxu0 0
    %1187 = vmatprep.subr.bf16.mxu0 0
    %1188 = vmatpush1.bf16.msra.mxu0 0
    %1189 = vmatprep.subr.bf16.mxu0 0
    %1190 = vmatpush1.bf16.msra.mxu0 0
    %1191 = vmatprep.subr.bf16.mxu0 0
    %1192 = vmatpush1.bf16.msra.mxu0 0
    %1193 = vmatprep.subr.bf16.mxu0 0
    %1194 = vmatpush1.bf16.msra.mxu0 0
    %1195 = vmatprep.subr.bf16.mxu0 0
    %1196 = vmatpush1.bf16.msra.mxu0 0
    %1197 = vmatprep.subr.bf16.mxu0 0
    %1198 = vmatpush1.bf16.msra.mxu0 0
    %1199 = vmatprep.subr.bf16.mxu0 0
    %1200 = vmatpush1.bf16.msra.mxu0 0
    %1201 = vmatprep.subr.bf16.mxu0 0
    %1202 = vmatpush1.bf16.msra.mxu0 0
    %1203 = vmatprep.subr.bf16.mxu0 0
    %1204 = vmatpush1.bf16.msra.mxu0 0
    %1205 = vmatprep.mubr.bf16.mxu0 0
    %1206 = vmatmul.mubr.bf16.gmra.mrb[0].mxu0 %v1171
    %v1207 = vpop.f32.mrb[0].mxu0
    %v1208 = vadd.f32 %v1144, %v1207
    %v1209 = vpop.f32.mrb[0].mxu0
    %v1210 = vpop.f32.mrb[0].mxu0
    %v1211 = vpop.f32.mrb[0].mxu0
    %1212 = vdwg.mxu0
    %v1213 = vtanh.pop %v1208
    %v1214 = vld [vmem:[#allocation4 + $0x10] sm:$0xf]
    %v1215 = vld [vmem:[#allocation4 + $0x34] sm:$0xf]
    %v1216 = vld [vmem:[#allocation4 + $0x58] sm:$0xf]
    %v1217 = vld [vmem:[#allocation4 + $0x7c] sm:$0xf]
    %v1218 = vld [vmem:[%s4 + $0xc] sm:$0x1]
    %v1219 = vpack.c.bf16 %v1213, %v1213
    %v1221 = vlaneseq
    %v1222 = vshrl.u32 %v1221, 7
    %v1223 = vsub.s32 0, %v1222
    %v1224 = vrot.slane %v1218, %v1223
    %v1230 = vunpack.c.l.b16 %v1214
    %v1231 = vunpack.c.l.b16 %v1215
    %v1232 = vunpack.c.l.b16 %v1216
    %v1233 = vunpack.c.l.b16 %v1217
    %v1234 = vpack.c.b16 %v1231, %v1230
    %v1235 = vpack.c.b16 %v1233, %v1232
    %vm1238 = vcmask 261120
    %v1240 = vsel %vm1238, %v1219, 0
    %1242 = vmatprep.subr.bf16.mxu0 0
    %1243 = vmatpush1.bf16.msra.mxu0 %v1234
    %1244 = vmatprep.subr.bf16.mxu0 0
    %1245 = vmatpush1.bf16.msra.mxu0 %v1235
    %1246 = vmatprep.subr.bf16.mxu0 0
    %1247 = vmatpush1.bf16.msra.mxu0 0
    %1248 = vmatprep.subr.bf16.mxu0 0
    %1249 = vmatpush1.bf16.msra.mxu0 0
    %1250 = vmatprep.subr.bf16.mxu0 0
    %1251 = vmatpush1.bf16.msra.mxu0 0
    %1252 = vmatprep.subr.bf16.mxu0 0
    %1253 = vmatpush1.bf16.msra.mxu0 0
    %1254 = vmatprep.subr.bf16.mxu0 0
    %1255 = vmatpush1.bf16.msra.mxu0 0
    %1256 = vmatprep.subr.bf16.mxu0 0
    %1257 = vmatpush1.bf16.msra.mxu0 0
    %1258 = vmatprep.subr.bf16.mxu0 0
    %1259 = vmatpush1.bf16.msra.mxu0 0
    %1260 = vmatprep.subr.bf16.mxu0 0
    %1261 = vmatpush1.bf16.msra.mxu0 0
    %1262 = vmatprep.subr.bf16.mxu0 0
    %1263 = vmatpush1.bf16.msra.mxu0 0
    %1264 = vmatprep.subr.bf16.mxu0 0
    %1265 = vmatpush1.bf16.msra.mxu0 0
    %1266 = vmatprep.subr.bf16.mxu0 0
    %1267 = vmatpush1.bf16.msra.mxu0 0
    %1268 = vmatprep.subr.bf16.mxu0 0
    %1269 = vmatpush1.bf16.msra.mxu0 0
    %1270 = vmatprep.subr.bf16.mxu0 0
    %1271 = vmatpush1.bf16.msra.mxu0 0
    %1272 = vmatprep.subr.bf16.mxu0 0
    %1273 = vmatpush1.bf16.msra.mxu0 0
    %1274 = vmatprep.mubr.bf16.mxu0 0
    %1275 = vmatmul.mubr.bf16.gmra.mrb[0].mxu0 %v1240
    %v1276 = vpop.f32.mrb[0].mxu0
    %v1277 = vadd.f32 %v1224, %v1276
    %v1278 = vpop.f32.mrb[0].mxu0
    %v1279 = vpop.f32.mrb[0].mxu0
    %v1280 = vpop.f32.mrb[0].mxu0
    %1281 = vdwg.mxu0
    %v1282 = vld [vmem:[%s4 + $0xd] sm:$0x1]
    %v1283 = vld [vmem:[%s4 + $0xe] sm:$0x1]
    %v1284 = vsel %vm1238, %v1277, 0.0
    %v1285 = vrot.slane %v1284, 4
    %v1286 = vadd.f32 %v1284, %v1285
    %v1287 = vrot.slane %v1286, 2
    %v1288 = vadd.f32 %v1286, %v1287
    %v1289 = vrot.slane %v1288, 1
    %v1290 = vadd.f32 %v1288, %v1289
    %v1291 = vmul.f32 %v1290, %v1096
    %v1292 = vmul.f32 %v1277, %v1277
    %v1293 = vsel %vm1238, %v1292, 0.0
    %v1294 = vrot.slane %v1293, 4
    %v1295 = vadd.f32 %v1293, %v1294
    %v1296 = vrot.slane %v1295, 2
    %v1297 = vadd.f32 %v1295, %v1296
    %v1298 = vrot.slane %v1297, 1
    %v1299 = vadd.f32 %v1297, %v1298
    %v1300 = vmul.f32 %v1299, %v1096
    %v1301 = vmul.f32 %v1291, %v1291
    %v1302 = vsub.f32 %v1300, %v1301
    %v1303 = vmax.f32 %v1302, 0.0
    %v1304 = vsub.f32 %v1277, %v1291
    %v1305 = vadd.f32 %v1303, 1e-05
    %v1306 = vrsqrt.pop %v1305
    %v1307 = vmul.f32 %v1304, %v1306
    %v1309 = vlaneseq
    %v1310 = vshrl.u32 %v1309, 7
    %v1311 = vsub.s32 0, %v1310
    %v1312 = vrot.slane %v1282, %v1311
    %v1314 = vmul.f32 %v1307, %v1312
    %v1316 = vlaneseq
    %v1317 = vshrl.u32 %v1316, 7
    %v1318 = vsub.s32 0, %v1317
    %v1319 = vrot.slane %v1283, %v1318
    %v1321 = vadd.f32 %v1314, %v1319
    %v1322 = vtanh.pop %v1321
    %v1323 = vadd.f32 %v1322, %v925
    %v1324 = vld [vmem:[#allocation4 + $0x14] sm:$0xf]
    %v1325 = vld [vmem:[#allocation4 + $0x38] sm:$0xf]
    %v1326 = vld [vmem:[#allocation4 + $0x5c] sm:$0xf]
    %v1327 = vld [vmem:[#allocation4 + $0x80] sm:$0xf]
    %v1328 = vld [vmem:[%s4 + $0xf] sm:$0x1]
    %v1329 = vpack.c.bf16 %v1323, %v1323
    %v1331 = vlaneseq
    %v1332 = vshrl.u32 %v1331, 7
    %v1333 = vsub.s32 0, %v1332
    %v1334 = vrot.slane %v1328, %v1333
    %v1340 = vunpack.c.l.b16 %v1324
    %v1341 = vunpack.c.l.b16 %v1325
    %v1342 = vunpack.c.l.b16 %v1326
    %v1343 = vunpack.c.l.b16 %v1327
    %v1344 = vpack.c.b16 %v1341, %v1340
    %v1345 = vpack.c.b16 %v1343, %v1342
    %v1349 = vsel %vm1238, %v1329, 0
    %1351 = vmatprep.subr.bf16.mxu0 0
    %1352 = vmatpush1.bf16.msra.mxu0 %v1344
    %1353 = vmatprep.subr.bf16.mxu0 0
    %1354 = vmatpush1.bf16.msra.mxu0 %v1345
    %1355 = vmatprep.subr.bf16.mxu0 0
    %1356 = vmatpush1.bf16.msra.mxu0 0
    %1357 = vmatprep.subr.bf16.mxu0 0
    %1358 = vmatpush1.bf16.msra.mxu0 0
    %1359 = vmatprep.subr.bf16.mxu0 0
    %1360 = vmatpush1.bf16.msra.mxu0 0
    %1361 = vmatprep.subr.bf16.mxu0 0
    %1362 = vmatpush1.bf16.msra.mxu0 0
    %1363 = vmatprep.subr.bf16.mxu0 0
    %1364 = vmatpush1.bf16.msra.mxu0 0
    %1365 = vmatprep.subr.bf16.mxu0 0
    %1366 = vmatpush1.bf16.msra.mxu0 0
    %1367 = vmatprep.subr.bf16.mxu0 0
    %1368 = vmatpush1.bf16.msra.mxu0 0
    %1369 = vmatprep.subr.bf16.mxu0 0
    %1370 = vmatpush1.bf16.msra.mxu0 0
    %1371 = vmatprep.subr.bf16.mxu0 0
    %1372 = vmatpush1.bf16.msra.mxu0 0
    %1373 = vmatprep.subr.bf16.mxu0 0
    %1374 = vmatpush1.bf16.msra.mxu0 0
    %1375 = vmatprep.subr.bf16.mxu0 0
    %1376 = vmatpush1.bf16.msra.mxu0 0
    %1377 = vmatprep.subr.bf16.mxu0 0
    %1378 = vmatpush1.bf16.msra.mxu0 0
    %1379 = vmatprep.subr.bf16.mxu0 0
    %1380 = vmatpush1.bf16.msra.mxu0 0
    %1381 = vmatprep.subr.bf16.mxu0 0
    %1382 = vmatpush1.bf16.msra.mxu0 0
    %1383 = vmatprep.mubr.bf16.mxu0 0
    %1384 = vmatmul.mubr.bf16.gmra.mrb[0].mxu0 %v1349
    %v1385 = vpop.f32.mrb[0].mxu0
    %v1386 = vadd.f32 %v1334, %v1385
    %v1387 = vpop.f32.mrb[0].mxu0
    %v1388 = vpop.f32.mrb[0].mxu0
    %v1389 = vpop.f32.mrb[0].mxu0
    %1390 = vdwg.mxu0
    %v1391 = vtanh.pop %v1386
    %v1392 = vld [vmem:[#allocation4 + $0x18] sm:$0xf]
    %v1393 = vld [vmem:[#allocation4 + $0x3c] sm:$0xf]
    %v1394 = vld [vmem:[%s4 + $0x10] sm:$0x1]
    %v1395 = vpack.c.bf16 %v1391, %v1391
    %v1397 = vlaneseq
    %v1398 = vshrl.u32 %v1397, 7
    %v1399 = vsub.s32 0, %v1398
    %v1400 = vrot.slane %v1394, %v1399
    %v1404 = vunpack.c.l.b16 %v1392
    %v1405 = vunpack.c.l.b16 %v1393
    %v1406 = vpack.c.b16 %v1405, %v1404
    %vm1408 = vcmask 130048
    %v1410 = vsel %vm1408, %v1395, 0
    %1412 = vmatprep.subr.bf16.mxu0 0
    %1413 = vmatpush1.bf16.msra.mxu0 %v1406
    %1414 = vmatprep.subr.bf16.mxu0 0
    %1415 = vmatpush1.bf16.msra.mxu0 0
    %1416 = vmatprep.subr.bf16.mxu0 0
    %1417 = vmatpush1.bf16.msra.mxu0 0
    %1418 = vmatprep.subr.bf16.mxu0 0
    %1419 = vmatpush1.bf16.msra.mxu0 0
    %1420 = vmatprep.subr.bf16.mxu0 0
    %1421 = vmatpush1.bf16.msra.mxu0 0
    %1422 = vmatprep.subr.bf16.mxu0 0
    %1423 = vmatpush1.bf16.msra.mxu0 0
    %1424 = vmatprep.subr.bf16.mxu0 0
    %1425 = vmatpush1.bf16.msra.mxu0 0
    %1426 = vmatprep.subr.bf16.mxu0 0
    %1427 = vmatpush1.bf16.msra.mxu0 0
    %1428 = vmatprep.subr.bf16.mxu0 0
    %1429 = vmatpush1.bf16.msra.mxu0 0
    %1430 = vmatprep.subr.bf16.mxu0 0
    %1431 = vmatpush1.bf16.msra.mxu0 0
    %1432 = vmatprep.subr.bf16.mxu0 0
    %1433 = vmatpush1.bf16.msra.mxu0 0
    %1434 = vmatprep.subr.bf16.mxu0 0
    %1435 = vmatpush1.bf16.msra.mxu0 0
    %1436 = vmatprep.subr.bf16.mxu0 0
    %1437 = vmatpush1.bf16.msra.mxu0 0
    %1438 = vmatprep.subr.bf16.mxu0 0
    %1439 = vmatpush1.bf16.msra.mxu0 0
    %1440 = vmatprep.subr.bf16.mxu0 0
    %1441 = vmatpush1.bf16.msra.mxu0 0
    %1442 = vmatprep.subr.bf16.mxu0 0
    %1443 = vmatpush1.bf16.msra.mxu0 0
    %1444 = vmatprep.mubr.bf16.mxu0 0
    %1445 = vmatmul.mubr.bf16.gmra.mrb[0].mxu0 %v1410
    %v1446 = vpop.f32.mrb[0].mxu0
    %v1447 = vadd.f32 %v1400, %v1446
    %v1448 = vpop.f32.mrb[0].mxu0
    %v1449 = vpop.f32.mrb[0].mxu0
    %v1450 = vpop.f32.mrb[0].mxu0
    %1451 = vdwg.mxu0
    %v1452 = vld [vmem:[%s4 + $0x11] sm:$0x1]
    %v1453 = vld [vmem:[%s4 + $0x12] sm:$0x1]
    %v1454 = vsel %vm1408, %v1447, 0.0
    %v1455 = vrot.slane %v1454, 4
    %v1456 = vadd.f32 %v1454, %v1455
    %v1457 = vrot.slane %v1456, 2
    %v1458 = vadd.f32 %v1456, %v1457
    %v1459 = vrot.slane %v1458, 1
    %v1460 = vadd.f32 %v1458, %v1459
    %v1461 = vmul.f32 %v1460, %v1096
    %v1462 = vmul.f32 %v1447, %v1447
    %v1463 = vsel %vm1408, %v1462, 0.0
    %v1464 = vrot.slane %v1463, 4
    %v1465 = vadd.f32 %v1463, %v1464
    %v1466 = vrot.slane %v1465, 2
    %v1467 = vadd.f32 %v1465, %v1466
    %v1468 = vrot.slane %v1467, 1
    %v1469 = vadd.f32 %v1467, %v1468
    %v1470 = vmul.f32 %v1469, %v1096
    %v1471 = vmul.f32 %v1461, %v1461
    %v1472 = vsub.f32 %v1470, %v1471
    %v1473 = vmax.f32 %v1472, 0.0
    %v1474 = vsub.f32 %v1447, %v1461
    %v1475 = vadd.f32 %v1473, 1e-05
    %v1476 = vrsqrt.pop %v1475
    %v1477 = vmul.f32 %v1474, %v1476
    %v1479 = vlaneseq
    %v1480 = vshrl.u32 %v1479, 7
    %v1481 = vsub.s32 0, %v1480
    %v1482 = vrot.slane %v1452, %v1481
    %v1484 = vmul.f32 %v1477, %v1482
    %v1486 = vlaneseq
    %v1487 = vshrl.u32 %v1486, 7
    %v1488 = vsub.s32 0, %v1487
    %v1489 = vrot.slane %v1453, %v1488
    %v1491 = vadd.f32 %v1484, %v1489
    %v1492 = vtanh.pop %v1491
    %v1493 = vadd.f32 %v1492, %v964
    %v1494 = vld [vmem:[#allocation4 + $0x1c] sm:$0xf]
    %v1495 = vld [vmem:[#allocation4 + $0x40] sm:$0xf]
    %v1496 = vld [vmem:[%s4 + $0x13] sm:$0x1]
    %v1497 = vpack.c.bf16 %v1493, %v1493
    %v1499 = vlaneseq
    %v1500 = vshrl.u32 %v1499, 7
    %v1501 = vsub.s32 0, %v1500
    %v1502 = vrot.slane %v1496, %v1501
    %v1506 = vunpack.c.l.b16 %v1494
    %v1507 = vunpack.c.l.b16 %v1495
    %v1508 = vpack.c.b16 %v1507, %v1506
    %v1511 = vsel %vm1408, %v1497, 0
    %1513 = vmatprep.subr.bf16.mxu0 0
    %1514 = vmatpush1.bf16.msra.mxu0 %v1508
    %1515 = vmatprep.subr.bf16.mxu0 0
    %1516 = vmatpush1.bf16.msra.mxu0 0
    %1517 = vmatprep.subr.bf16.mxu0 0
    %1518 = vmatpush1.bf16.msra.mxu0 0
    %1519 = vmatprep.subr.bf16.mxu0 0
    %1520 = vmatpush1.bf16.msra.mxu0 0
    %1521 = vmatprep.subr.bf16.mxu0 0
    %1522 = vmatpush1.bf16.msra.mxu0 0
    %1523 = vmatprep.subr.bf16.mxu0 0
    %1524 = vmatpush1.bf16.msra.mxu0 0
    %1525 = vmatprep.subr.bf16.mxu0 0
    %1526 = vmatpush1.bf16.msra.mxu0 0
    %1527 = vmatprep.subr.bf16.mxu0 0
    %1528 = vmatpush1.bf16.msra.mxu0 0
    %1529 = vmatprep.subr.bf16.mxu0 0
    %1530 = vmatpush1.bf16.msra.mxu0 0
    %1531 = vmatprep.subr.bf16.mxu0 0
    %1532 = vmatpush1.bf16.msra.mxu0 0
    %1533 = vmatprep.subr.bf16.mxu0 0
    %1534 = vmatpush1.bf16.msra.mxu0 0
    %1535 = vmatprep.subr.bf16.mxu0 0
    %1536 = vmatpush1.bf16.msra.mxu0 0
    %1537 = vmatprep.subr.bf16.mxu0 0
    %1538 = vmatpush1.bf16.msra.mxu0 0
    %1539 = vmatprep.subr.bf16.mxu0 0
    %1540 = vmatpush1.bf16.msra.mxu0 0
    %1541 = vmatprep.subr.bf16.mxu0 0
    %1542 = vmatpush1.bf16.msra.mxu0 0
    %1543 = vmatprep.subr.bf16.mxu0 0
    %1544 = vmatpush1.bf16.msra.mxu0 0
    %1545 = vmatprep.mubr.bf16.mxu0 0
    %1546 = vmatmul.mubr.bf16.gmra.mrb[0].mxu0 %v1511
    %v1547 = vpop.f32.mrb[0].mxu0
    %v1548 = vadd.f32 %v1502, %v1547
    %v1549 = vpop.f32.mrb[0].mxu0
    %v1550 = vpop.f32.mrb[0].mxu0
    %v1551 = vpop.f32.mrb[0].mxu0
    %1552 = vdwg.mxu0
    %v1553 = vtanh.pop %v1548
    %v1554 = vld [vmem:[#allocation4 + $0x20] sm:$0xf]
    %v1555 = vld [vmem:[#allocation4 + $0x44] sm:$0xf]
    %v1556 = vld [vmem:[%s4 + $0x14] sm:$0x1]
    %v1557 = vpack.c.bf16 %v1553, %v1553
    %v1559 = vlaneseq
    %v1560 = vshrl.u32 %v1559, 7
    %v1561 = vsub.s32 0, %v1560
    %v1562 = vrot.slane %v1556, %v1561
    %v1566 = vunpack.c.l.b16 %v1554
    %v1567 = vunpack.c.l.b16 %v1555
    %v1568 = vpack.c.b16 %v1567, %v1566
    %v1571 = vsel %vm1408, %v1557, 0
    %1573 = vmatprep.subr.bf16.mxu0 0
    %1574 = vmatpush1.bf16.msra.mxu0 %v1568
    %1575 = vmatprep.subr.bf16.mxu0 0
    %1576 = vmatpush1.bf16.msra.mxu0 0
    %1577 = vmatprep.subr.bf16.mxu0 0
    %1578 = vmatpush1.bf16.msra.mxu0 0
    %1579 = vmatprep.subr.bf16.mxu0 0
    %1580 = vmatpush1.bf16.msra.mxu0 0
    %1581 = vmatprep.subr.bf16.mxu0 0
    %1582 = vmatpush1.bf16.msra.mxu0 0
    %1583 = vmatprep.subr.bf16.mxu0 0
    %1584 = vmatpush1.bf16.msra.mxu0 0
    %1585 = vmatprep.subr.bf16.mxu0 0
    %1586 = vmatpush1.bf16.msra.mxu0 0
    %1587 = vmatprep.subr.bf16.mxu0 0
    %1588 = vmatpush1.bf16.msra.mxu0 0
    %1589 = vmatprep.subr.bf16.mxu0 0
    %1590 = vmatpush1.bf16.msra.mxu0 0
    %1591 = vmatprep.subr.bf16.mxu0 0
    %1592 = vmatpush1.bf16.msra.mxu0 0
    %1593 = vmatprep.subr.bf16.mxu0 0
    %1594 = vmatpush1.bf16.msra.mxu0 0
    %1595 = vmatprep.subr.bf16.mxu0 0
    %1596 = vmatpush1.bf16.msra.mxu0 0
    %1597 = vmatprep.subr.bf16.mxu0 0
    %1598 = vmatpush1.bf16.msra.mxu0 0
    %1599 = vmatprep.subr.bf16.mxu0 0
    %1600 = vmatpush1.bf16.msra.mxu0 0
    %1601 = vmatprep.subr.bf16.mxu0 0
    %1602 = vmatpush1.bf16.msra.mxu0 0
    %1603 = vmatprep.subr.bf16.mxu0 0
    %1604 = vmatpush1.bf16.msra.mxu0 0
    %1605 = vmatprep.mubr.bf16.mxu0 0
    %1606 = vmatmul.mubr.bf16.gmra.mrb[0].mxu0 %v1571
    %v1607 = vpop.f32.mrb[0].mxu0
    %v1608 = vadd.f32 %v1562, %v1607
    %v1609 = vpop.f32.mrb[0].mxu0
    %v1610 = vpop.f32.mrb[0].mxu0
    %v1611 = vpop.f32.mrb[0].mxu0
    %1612 = vdwg.mxu0
    %vm1613 = vcmask 15360
    %1614 = vst.msk [vmem:[%s5] sm:$0xff] %vm1613, %v1608
    // Predicated region
    $region30: #{noise_model_forward.1} parent=1 // pred_check
      _
    $region31: #{noise_model_forward.1} parent=1 // pred_check_branch
      %1616 = sbr.rel (0) target = $region33
    $region32: #{noise_model_forward.1} parent=1 // pred_region
      _
    $region33: #{noise_model_forward.1} parent=1 // pred_fallthru
      _
    // Predicated region
    $region34: #{noise_model_forward.1} parent=1 // pred_check
      _
    $region35: #{noise_model_forward.1} parent=1 // pred_check_branch
      %1618 = sbr.rel (0) target = $region37
    $region36: #{noise_model_forward.1} parent=1 // pred_region
      _
    $region37: #{noise_model_forward.1} parent=1 // pred_fallthru
      _
    %1619 = vsyncpa [#allocation3], 1
    %1620 = vsyncpa [#allocation5], 1

</llo_original>
